<compile_context>
chip_gen: v7x
topology: tpu7x:2x2x1
jax: 0.10.0
libtpu: 0.0.40
codegen_flags: <defaults>
</compile_context>

<pallas_src>
from itertools import combinations_with_replacement
import functools

import numpy as np
import jax
import jax.numpy as jnp
from jax.experimental import pallas as pl
from jax.experimental.pallas import tpu as pltpu


def _round_up(x: int, m: int) -> int:
    return (x + m - 1) // m * m


def _poly2_kernel(x_ref, o_ref, *, num_features, include_bias, out_cols,
                  out_cols_padded):
    """One batch tile: expand (TB, F) -> (TB, P_pad) degree-2 features."""
    F = num_features
    x = x_ref[...]                                   # (TB, F) f32, in VMEM
    tb = x.shape[0]
    col = 0

    if include_bias:
        o_ref[:, 0:1] = jnp.ones((tb, 1), dtype=o_ref.dtype)
        col = 1

    # Degree-1 block: pure copy of x (no matmul, no multiply).
    o_ref[:, col:col + F] = x
    col += F

    # Degree-2 blocks on the VPU: for each i (static unroll, F is small &
    # static) the columns {x_i*x_j : j >= i} are one contiguous slab equal to
    # broadcast(x[:, i]) * x[:, i:].  This exactly matches the
    # combinations_with_replacement ordering of the PyTorch module.
    for i in range(F):
        width = F - i
        xi = x[:, i:i + 1]                           # (TB, 1) -> lane-broadcast
        o_ref[:, col:col + width] = xi * x[:, i:]
        col += width

    # Zero the lane padding so the whole out slab is written (sliced off in
    # the wrapper).
    if out_cols_padded > out_cols:
        o_ref[:, out_cols:out_cols_padded] = jnp.zeros(
            (tb, out_cols_padded - out_cols), dtype=o_ref.dtype)


def polynomial_features(x, degree: int = 2, include_bias: bool = False,
                        *, max_batch_tile: int = 1024):
    """Pallas-TPU equivalent of PolynomialFeatures(degree=2).forward(x)."""
    if degree != 2:
        # TODO(synk): general-degree expansion (module default is degree=2).
        raise NotImplementedError("Only degree=2 is implemented in Pallas.")

    x = jnp.asarray(x, jnp.float32)
    B, F = x.shape
    P = (1 if include_bias else 0) + F + F * (F + 1) // 2
    P_pad = _round_up(P, 128)                        # lane-dense output slab

    # Batch tile: multiple of 8 (f32 sublane), as large as possible while
    # keeping the double-buffered (in + out) tiles well inside scoped VMEM.
    bytes_per_row = 4 * (F + P_pad)
    tb = (4 * 1024 * 1024) // max(bytes_per_row, 1)  # ~8 MiB double-buffered
    tb = max(8, min(max_batch_tile, tb))
    tb = (tb // 8) * 8
    tb = min(tb, _round_up(B, 8))
    B_pad = _round_up(B, tb)

    if B_pad != B:
        x_in = jnp.concatenate(
            [x, jnp.zeros((B_pad - B, F), jnp.float32)], axis=0)
    else:
        x_in = x

    kernel = functools.partial(
        _poly2_kernel,
        num_features=F,
        include_bias=include_bias,
        out_cols=P,
        out_cols_padded=P_pad,
    )

    out_padded = pl.pallas_call(
        kernel,
        out_shape=jax.ShapeDtypeStruct((B_pad, P_pad), jnp.float32),
        grid_spec=pltpu.PrefetchScalarGridSpec(
            num_scalar_prefetch=0,
            grid=(B_pad // tb,),
            in_specs=[pl.BlockSpec((tb, F), lambda b: (b, 0))],
            out_specs=pl.BlockSpec((tb, P_pad), lambda b: (b, 0)),
        ),
        compiler_params=pltpu.CompilerParams(
            dimension_semantics=("parallel",),
            vmem_limit_bytes=32 * 1024 * 1024,
        ),
    )(x_in)

    return out_padded[:B, :P]


def _reference_poly2(x, include_bias: bool = False):
    """Pure-JAX replica of the PyTorch forward (ground truth)."""
    b, F = x.shape
    feats = []
    if include_bias:
        feats.append(jnp.ones((b, 1), x.dtype))
    for d in range(1, 3):
        for combo in combinations_with_replacement(range(F), d):
            term = jnp.ones((b, 1), x.dtype)
            for idx in combo:
                term = term * x[:, idx:idx + 1]
            feats.append(term)
    return jnp.concatenate(feats, axis=1)


if __name__ == "__main__":
    key = jax.random.PRNGKey(0)
    batch, num_features = 256, 8
    x = jax.random.normal(key, (batch, num_features), dtype=jnp.float32)

    out = polynomial_features(x, degree=2, include_bias=False)
    out = jax.block_until_ready(out)

    ref = _reference_poly2(x, include_bias=False)
    expected_cols = num_features + num_features * (num_features + 1) // 2
    assert out.shape == (batch, expected_cols), out.shape
    np.testing.assert_allclose(np.asarray(out), np.asarray(ref),
                               rtol=1e-6, atol=1e-6)
    print("KERNEL_OK")
</pallas_src>

<mosaic_0001>
module attributes {stable_mosaic.version = 11 : i64} {
  func.func @_poly2_kernel(%arg0: i32, %arg1: memref<256x8xf32, #tpu.memory_space<vmem>>, %arg2: memref<256x128xf32, #tpu.memory_space<vmem>>) attributes {dimension_semantics = [#tpu.dimension_semantics<parallel>], iteration_bounds = array<i64: 1>, scalar_prefetch = 0 : i64, scratch_operands = 0 : i64, tpu.core_type = #tpu.core_type<tc>, window_params = [{transform_indices = @transform_0, window_bounds = array<i64: 256, 8>}, {transform_indices = @transform_1, window_bounds = array<i64: 256, 128>}]} {
    %c0 = arith.constant 0 : index
    %c0_0 = arith.constant 0 : index
    %0 = vector.load %arg1[%c0, %c0_0] : memref<256x8xf32, #tpu.memory_space<vmem>>, vector<256x8xf32>
    %c0_1 = arith.constant 0 : index
    %c0_2 = arith.constant 0 : index
    %1 = vector.load %arg2[%c0_1, %c0_2] : memref<256x128xf32, #tpu.memory_space<vmem>>, vector<256x8xf32>
    tpu.vector_store %arg2[%c0_1, %c0_2], %0 {strides = array<i32>} : memref<256x128xf32, #tpu.memory_space<vmem>>, vector<256x8xf32>,
    %2 = vector.extract_strided_slice %0 {offsets = [0, 0], sizes = [256, 1], strides = [1, 1]} : vector<256x8xf32> to vector<256x1xf32>
    %3 = vector.broadcast %2 : vector<256x1xf32> to vector<256x8xf32>
    %4 = arith.mulf %3, %0 : vector<256x8xf32>
    %c0_3 = arith.constant 0 : index
    %c8 = arith.constant 8 : index
    %5 = vector.load %arg2[%c0_3, %c8] : memref<256x128xf32, #tpu.memory_space<vmem>>, vector<256x8xf32>
    tpu.vector_store %arg2[%c0_3, %c8], %4 {strides = array<i32>} : memref<256x128xf32, #tpu.memory_space<vmem>>, vector<256x8xf32>,
    %6 = vector.extract_strided_slice %0 {offsets = [0, 1], sizes = [256, 1], strides = [1, 1]} : vector<256x8xf32> to vector<256x1xf32>
    %7 = vector.extract_strided_slice %0 {offsets = [0, 1], sizes = [256, 7], strides = [1, 1]} : vector<256x8xf32> to vector<256x7xf32>
    %8 = vector.broadcast %6 : vector<256x1xf32> to vector<256x7xf32>
    %9 = arith.mulf %8, %7 : vector<256x7xf32>
    %c0_4 = arith.constant 0 : index
    %c16 = arith.constant 16 : index
    %10 = vector.load %arg2[%c0_4, %c16] : memref<256x128xf32, #tpu.memory_space<vmem>>, vector<256x7xf32>
    tpu.vector_store %arg2[%c0_4, %c16], %9 {strides = array<i32>} : memref<256x128xf32, #tpu.memory_space<vmem>>, vector<256x7xf32>,
    %11 = vector.extract_strided_slice %0 {offsets = [0, 2], sizes = [256, 1], strides = [1, 1]} : vector<256x8xf32> to vector<256x1xf32>
    %12 = vector.extract_strided_slice %0 {offsets = [0, 2], sizes = [256, 6], strides = [1, 1]} : vector<256x8xf32> to vector<256x6xf32>
    %13 = vector.broadcast %11 : vector<256x1xf32> to vector<256x6xf32>
    %14 = arith.mulf %13, %12 : vector<256x6xf32>
    %c0_5 = arith.constant 0 : index
    %c23 = arith.constant 23 : index
    %15 = vector.load %arg2[%c0_5, %c23] : memref<256x128xf32, #tpu.memory_space<vmem>>, vector<256x6xf32>
    tpu.vector_store %arg2[%c0_5, %c23], %14 {strides = array<i32>} : memref<256x128xf32, #tpu.memory_space<vmem>>, vector<256x6xf32>,
    %16 = vector.extract_strided_slice %0 {offsets = [0, 3], sizes = [256, 1], strides = [1, 1]} : vector<256x8xf32> to vector<256x1xf32>
    %17 = vector.extract_strided_slice %0 {offsets = [0, 3], sizes = [256, 5], strides = [1, 1]} : vector<256x8xf32> to vector<256x5xf32>
    %18 = vector.broadcast %16 : vector<256x1xf32> to vector<256x5xf32>
    %19 = arith.mulf %18, %17 : vector<256x5xf32>
    %c0_6 = arith.constant 0 : index
    %c29 = arith.constant 29 : index
    %20 = vector.load %arg2[%c0_6, %c29] : memref<256x128xf32, #tpu.memory_space<vmem>>, vector<256x5xf32>
    tpu.vector_store %arg2[%c0_6, %c29], %19 {strides = array<i32>} : memref<256x128xf32, #tpu.memory_space<vmem>>, vector<256x5xf32>,
    %21 = vector.extract_strided_slice %0 {offsets = [0, 4], sizes = [256, 1], strides = [1, 1]} : vector<256x8xf32> to vector<256x1xf32>
    %22 = vector.extract_strided_slice %0 {offsets = [0, 4], sizes = [256, 4], strides = [1, 1]} : vector<256x8xf32> to vector<256x4xf32>
    %23 = vector.broadcast %21 : vector<256x1xf32> to vector<256x4xf32>
    %24 = arith.mulf %23, %22 : vector<256x4xf32>
    %c0_7 = arith.constant 0 : index
    %c34 = arith.constant 34 : index
    %25 = vector.load %arg2[%c0_7, %c34] : memref<256x128xf32, #tpu.memory_space<vmem>>, vector<256x4xf32>
    tpu.vector_store %arg2[%c0_7, %c34], %24 {strides = array<i32>} : memref<256x128xf32, #tpu.memory_space<vmem>>, vector<256x4xf32>,
    %26 = vector.extract_strided_slice %0 {offsets = [0, 5], sizes = [256, 1], strides = [1, 1]} : vector<256x8xf32> to vector<256x1xf32>
    %27 = vector.extract_strided_slice %0 {offsets = [0, 5], sizes = [256, 3], strides = [1, 1]} : vector<256x8xf32> to vector<256x3xf32>
    %28 = vector.broadcast %26 : vector<256x1xf32> to vector<256x3xf32>
    %29 = arith.mulf %28, %27 : vector<256x3xf32>
    %c0_8 = arith.constant 0 : index
    %c38 = arith.constant 38 : index
    %30 = vector.load %arg2[%c0_8, %c38] : memref<256x128xf32, #tpu.memory_space<vmem>>, vector<256x3xf32>
    tpu.vector_store %arg2[%c0_8, %c38], %29 {strides = array<i32>} : memref<256x128xf32, #tpu.memory_space<vmem>>, vector<256x3xf32>,
    %31 = vector.extract_strided_slice %0 {offsets = [0, 6], sizes = [256, 1], strides = [1, 1]} : vector<256x8xf32> to vector<256x1xf32>
    %32 = vector.extract_strided_slice %0 {offsets = [0, 6], sizes = [256, 2], strides = [1, 1]} : vector<256x8xf32> to vector<256x2xf32>
    %33 = vector.broadcast %31 : vector<256x1xf32> to vector<256x2xf32>
    %34 = arith.mulf %33, %32 : vector<256x2xf32>
    %c0_9 = arith.constant 0 : index
    %c41 = arith.constant 41 : index
    %35 = vector.load %arg2[%c0_9, %c41] : memref<256x128xf32, #tpu.memory_space<vmem>>, vector<256x2xf32>
    tpu.vector_store %arg2[%c0_9, %c41], %34 {strides = array<i32>} : memref<256x128xf32, #tpu.memory_space<vmem>>, vector<256x2xf32>,
    %36 = vector.extract_strided_slice %0 {offsets = [0, 7], sizes = [256, 1], strides = [1, 1]} : vector<256x8xf32> to vector<256x1xf32>
    %37 = vector.extract_strided_slice %0 {offsets = [0, 7], sizes = [256, 1], strides = [1, 1]} : vector<256x8xf32> to vector<256x1xf32>
    %38 = arith.mulf %36, %37 : vector<256x1xf32>
    %c0_10 = arith.constant 0 : index
    %c43 = arith.constant 43 : index
    %39 = vector.load %arg2[%c0_10, %c43] : memref<256x128xf32, #tpu.memory_space<vmem>>, vector<256x1xf32>
    tpu.vector_store %arg2[%c0_10, %c43], %38 {strides = array<i32>} : memref<256x128xf32, #tpu.memory_space<vmem>>, vector<256x1xf32>,
    %cst = arith.constant 0.000000e+00 : f32
    %40 = vector.broadcast %cst : f32 to vector<256x84xf32>
    %c0_11 = arith.constant 0 : index
    %c44 = arith.constant 44 : index
    %41 = vector.load %arg2[%c0_11, %c44] : memref<256x128xf32, #tpu.memory_space<vmem>>, vector<256x84xf32>
    tpu.vector_store %arg2[%c0_11, %c44], %40 {strides = array<i32>} : memref<256x128xf32, #tpu.memory_space<vmem>>, vector<256x84xf32>,
    return
  }
  func.func @transform_0(%arg0: i32) -> (i32, i32) {
    %c0_i32 = arith.constant 0 : i32
    %c0_i32_0 = arith.constant 0 : i32
    return %arg0, %c0_i32 : i32, i32
  }
  func.func @transform_1(%arg0: i32) -> (i32, i32) {
    %c0_i32 = arith.constant 0 : i32
    %c0_i32_0 = arith.constant 0 : i32
    return %arg0, %c0_i32 : i32, i32
  }
}

</mosaic_0001>

<llo_original>
// kernel: tpu_custom_call.1
$region0: #{tpu_custom_call.1}
  #allocation0 [shape = 'u32[]', space=smem, size = 0x4, offset = 0x4, fixed_abs, tag = 'smem constant byte address 0x4 - core index']
  #allocation1 [shape = 'u32[144,128]{1,0:T(1,128)}', space=vmem, size = 0x12000, scoped, tag = 'internal scratch']
  %s0 = inlined_call_operand.vmem [shape: f32[256,8], index: 0, kind: input, shape index: {}]
  %s1 = inlined_call_operand.hbm [shape: f32[256,128], index: 1, kind: output, shape index: {}]
  %s2 = sld [smem:[#allocation0]]
  $region14: #{tpu_custom_call.1} parent=0
    _
  %s4 = ssub.s32 1, %s2
  %s5 = scalar_select 0, %s4, %s2
  $region1: #{tpu_custom_call.1} parent=0
    #allocation2 [shape = 'u8[131072]{0}', space=vmem, size = 0x20000, scoped, tag = 'output window, operand 0, single buffered']
    #allocation3 [shape = 's32[1]{0}', space=sflag, size = 0x4, scoped, tag = 'scoped memory for tpu_custom_call.1']
    %6 = vsyncpa [#allocation3], 0
    // Predicated region
    $region2: #{tpu_custom_call.1} parent=1 // pred_check
      _
    $region3: #{tpu_custom_call.1} parent=1 // pred_check_branch
      %8 = sbr.rel (0) target = $region5
    $region4: #{tpu_custom_call.1} parent=1 // pred_region
      _
    $region5: #{tpu_custom_call.1} parent=1 // pred_fallthru
      _
    %v9 = vld [vmem:[%s0] sm:$0xff]
    %v10 = vld [vmem:[%s0 + $0x8] sm:$0xff]
    %v11 = vld [vmem:[%s0 + $0x10] sm:$0xff]
    %v12 = vld [vmem:[%s0 + $0x18] sm:$0xff]
    %v13 = vld [vmem:[%s0 + $0x20] sm:$0xff]
    %v14 = vld [vmem:[%s0 + $0x28] sm:$0xff]
    %v15 = vld [vmem:[%s0 + $0x30] sm:$0xff]
    %v16 = vld [vmem:[%s0 + $0x38] sm:$0xff]
    %v17 = vld [vmem:[%s0 + $0x40] sm:$0xff]
    %v18 = vld [vmem:[%s0 + $0x48] sm:$0xff]
    %v19 = vld [vmem:[%s0 + $0x50] sm:$0xff]
    %v20 = vld [vmem:[%s0 + $0x58] sm:$0xff]
    %v21 = vld [vmem:[%s0 + $0x60] sm:$0xff]
    %v22 = vld [vmem:[%s0 + $0x68] sm:$0xff]
    %v23 = vld [vmem:[%s0 + $0x70] sm:$0xff]
    %v24 = vld [vmem:[%s0 + $0x78] sm:$0xff]
    %v25 = vld [vmem:[%s0 + $0x80] sm:$0xff]
    %v26 = vld [vmem:[%s0 + $0x88] sm:$0xff]
    %v27 = vld [vmem:[%s0 + $0x90] sm:$0xff]
    %v28 = vld [vmem:[%s0 + $0x98] sm:$0xff]
    %v29 = vld [vmem:[%s0 + $0xa0] sm:$0xff]
    %v30 = vld [vmem:[%s0 + $0xa8] sm:$0xff]
    %v31 = vld [vmem:[%s0 + $0xb0] sm:$0xff]
    %v32 = vld [vmem:[%s0 + $0xb8] sm:$0xff]
    %v33 = vld [vmem:[%s0 + $0xc0] sm:$0xff]
    %v34 = vld [vmem:[%s0 + $0xc8] sm:$0xff]
    %v35 = vld [vmem:[%s0 + $0xd0] sm:$0xff]
    %v36 = vld [vmem:[%s0 + $0xd8] sm:$0xff]
    %v37 = vld [vmem:[%s0 + $0xe0] sm:$0xff]
    %v38 = vld [vmem:[%s0 + $0xe8] sm:$0xff]
    %v39 = vld [vmem:[%s0 + $0xf0] sm:$0xff]
    %v40 = vld [vmem:[%s0 + $0xf8] sm:$0xff]
    %vm41 = vcmask 64512
    %42 = vst.msk [vmem:[#allocation2] sm:$0xff] %vm41, %v9
    %43 = vst.msk [vmem:[#allocation2 + $0x8] sm:$0xff] %vm41, %v10
    %44 = vst.msk [vmem:[#allocation2 + $0x10] sm:$0xff] %vm41, %v11
    %45 = vst.msk [vmem:[#allocation2 + $0x18] sm:$0xff] %vm41, %v12
    %46 = vst.msk [vmem:[#allocation2 + $0x20] sm:$0xff] %vm41, %v13
    %47 = vst.msk [vmem:[#allocation2 + $0x28] sm:$0xff] %vm41, %v14
    %48 = vst.msk [vmem:[#allocation2 + $0x30] sm:$0xff] %vm41, %v15
    %49 = vst.msk [vmem:[#allocation2 + $0x38] sm:$0xff] %vm41, %v16
    %50 = vst.msk [vmem:[#allocation2 + $0x40] sm:$0xff] %vm41, %v17
    %51 = vst.msk [vmem:[#allocation2 + $0x48] sm:$0xff] %vm41, %v18
    %52 = vst.msk [vmem:[#allocation2 + $0x50] sm:$0xff] %vm41, %v19
    %53 = vst.msk [vmem:[#allocation2 + $0x58] sm:$0xff] %vm41, %v20
    %54 = vst.msk [vmem:[#allocation2 + $0x60] sm:$0xff] %vm41, %v21
    %55 = vst.msk [vmem:[#allocation2 + $0x68] sm:$0xff] %vm41, %v22
    %56 = vst.msk [vmem:[#allocation2 + $0x70] sm:$0xff] %vm41, %v23
    %57 = vst.msk [vmem:[#allocation2 + $0x78] sm:$0xff] %vm41, %v24
    %58 = vst.msk [vmem:[#allocation2 + $0x80] sm:$0xff] %vm41, %v25
    %59 = vst.msk [vmem:[#allocation2 + $0x88] sm:$0xff] %vm41, %v26
    %60 = vst.msk [vmem:[#allocation2 + $0x90] sm:$0xff] %vm41, %v27
    %61 = vst.msk [vmem:[#allocation2 + $0x98] sm:$0xff] %vm41, %v28
    %62 = vst.msk [vmem:[#allocation2 + $0xa0] sm:$0xff] %vm41, %v29
    %63 = vst.msk [vmem:[#allocation2 + $0xa8] sm:$0xff] %vm41, %v30
    %64 = vst.msk [vmem:[#allocation2 + $0xb0] sm:$0xff] %vm41, %v31
    %65 = vst.msk [vmem:[#allocation2 + $0xb8] sm:$0xff] %vm41, %v32
    %66 = vst.msk [vmem:[#allocation2 + $0xc0] sm:$0xff] %vm41, %v33
    %67 = vst.msk [vmem:[#allocation2 + $0xc8] sm:$0xff] %vm41, %v34
    %68 = vst.msk [vmem:[#allocation2 + $0xd0] sm:$0xff] %vm41, %v35
    %69 = vst.msk [vmem:[#allocation2 + $0xd8] sm:$0xff] %vm41, %v36
    %70 = vst.msk [vmem:[#allocation2 + $0xe0] sm:$0xff] %vm41, %v37
    %71 = vst.msk [vmem:[#allocation2 + $0xe8] sm:$0xff] %vm41, %v38
    %72 = vst.msk [vmem:[#allocation2 + $0xf0] sm:$0xff] %vm41, %v39
    %73 = vst.msk [vmem:[#allocation2 + $0xf8] sm:$0xff] %vm41, %v40
    %75 = vset.pattern.permute.xlu0 0
    %76 = vperm.xlu0 %75, %v9
    %v77 = vpop.permute.xlu0 %76
    %80 = vset.pattern.permute.xlu0 0
    %81 = vperm.xlu0 %80, %v10
    %v82 = vpop.permute.xlu0 %81
    %85 = vset.pattern.permute.xlu0 0
    %86 = vperm.xlu0 %85, %v11
    %v87 = vpop.permute.xlu0 %86
    %90 = vset.pattern.permute.xlu0 0
    %91 = vperm.xlu0 %90, %v12
    %v92 = vpop.permute.xlu0 %91
    %95 = vset.pattern.permute.xlu0 0
    %96 = vperm.xlu0 %95, %v13
    %v97 = vpop.permute.xlu0 %96
    %100 = vset.pattern.permute.xlu0 0
    %101 = vperm.xlu0 %100, %v14
    %v102 = vpop.permute.xlu0 %101
    %105 = vset.pattern.permute.xlu0 0
    %106 = vperm.xlu0 %105, %v15
    %v107 = vpop.permute.xlu0 %106
    %110 = vset.pattern.permute.xlu0 0
    %111 = vperm.xlu0 %110, %v16
    %v112 = vpop.permute.xlu0 %111
    %115 = vset.pattern.permute.xlu0 0
    %116 = vperm.xlu0 %115, %v17
    %v117 = vpop.permute.xlu0 %116
    %120 = vset.pattern.permute.xlu0 0
    %121 = vperm.xlu0 %120, %v18
    %v122 = vpop.permute.xlu0 %121
    %125 = vset.pattern.permute.xlu0 0
    %126 = vperm.xlu0 %125, %v19
    %v127 = vpop.permute.xlu0 %126
    %130 = vset.pattern.permute.xlu0 0
    %131 = vperm.xlu0 %130, %v20
    %v132 = vpop.permute.xlu0 %131
    %135 = vset.pattern.permute.xlu0 0
    %136 = vperm.xlu0 %135, %v21
    %v137 = vpop.permute.xlu0 %136
    %140 = vset.pattern.permute.xlu0 0
    %141 = vperm.xlu0 %140, %v22
    %v142 = vpop.permute.xlu0 %141
    %145 = vset.pattern.permute.xlu0 0
    %146 = vperm.xlu0 %145, %v23
    %v147 = vpop.permute.xlu0 %146
    %150 = vset.pattern.permute.xlu0 0
    %151 = vperm.xlu0 %150, %v24
    %v152 = vpop.permute.xlu0 %151
    %155 = vset.pattern.permute.xlu0 0
    %156 = vperm.xlu0 %155, %v25
    %v157 = vpop.permute.xlu0 %156
    %160 = vset.pattern.permute.xlu0 0
    %161 = vperm.xlu0 %160, %v26
    %v162 = vpop.permute.xlu0 %161
    %165 = vset.pattern.permute.xlu0 0
    %166 = vperm.xlu0 %165, %v27
    %v167 = vpop.permute.xlu0 %166
    %170 = vset.pattern.permute.xlu0 0
    %171 = vperm.xlu0 %170, %v28
    %v172 = vpop.permute.xlu0 %171
    %175 = vset.pattern.permute.xlu0 0
    %176 = vperm.xlu0 %175, %v29
    %v177 = vpop.permute.xlu0 %176
    %180 = vset.pattern.permute.xlu0 0
    %181 = vperm.xlu0 %180, %v30
    %v182 = vpop.permute.xlu0 %181
    %185 = vset.pattern.permute.xlu0 0
    %186 = vperm.xlu0 %185, %v31
    %v187 = vpop.permute.xlu0 %186
    %190 = vset.pattern.permute.xlu0 0
    %191 = vperm.xlu0 %190, %v32
    %v192 = vpop.permute.xlu0 %191
    %195 = vset.pattern.permute.xlu0 0
    %196 = vperm.xlu0 %195, %v33
    %v197 = vpop.permute.xlu0 %196
    %200 = vset.pattern.permute.xlu0 0
    %201 = vperm.xlu0 %200, %v34
    %v202 = vpop.permute.xlu0 %201
    %205 = vset.pattern.permute.xlu0 0
    %206 = vperm.xlu0 %205, %v35
    %v207 = vpop.permute.xlu0 %206
    %210 = vset.pattern.permute.xlu0 0
    %211 = vperm.xlu0 %210, %v36
    %v212 = vpop.permute.xlu0 %211
    %215 = vset.pattern.permute.xlu0 0
    %216 = vperm.xlu0 %215, %v37
    %v217 = vpop.permute.xlu0 %216
    %220 = vset.pattern.permute.xlu0 0
    %221 = vperm.xlu0 %220, %v38
    %v222 = vpop.permute.xlu0 %221
    %225 = vset.pattern.permute.xlu0 0
    %226 = vperm.xlu0 %225, %v39
    %v227 = vpop.permute.xlu0 %226
    %230 = vset.pattern.permute.xlu0 0
    %231 = vperm.xlu0 %230, %v40
    %v232 = vpop.permute.xlu0 %231
    %v234 = vmul.f32 %v77, %v9
    %v235 = vmul.f32 %v82, %v10
    %v236 = vmul.f32 %v87, %v11
    %v237 = vmul.f32 %v92, %v12
    %v238 = vmul.f32 %v97, %v13
    %v239 = vmul.f32 %v102, %v14
    %v240 = vmul.f32 %v107, %v15
    %v241 = vmul.f32 %v112, %v16
    %v242 = vmul.f32 %v117, %v17
    %v243 = vmul.f32 %v122, %v18
    %v244 = vmul.f32 %v127, %v19
    %v245 = vmul.f32 %v132, %v20
    %v246 = vmul.f32 %v137, %v21
    %v247 = vmul.f32 %v142, %v22
    %v248 = vmul.f32 %v147, %v23
    %v249 = vmul.f32 %v152, %v24
    %v250 = vmul.f32 %v157, %v25
    %v251 = vmul.f32 %v162, %v26
    %v252 = vmul.f32 %v167, %v27
    %v253 = vmul.f32 %v172, %v28
    %v254 = vmul.f32 %v177, %v29
    %v255 = vmul.f32 %v182, %v30
    %v256 = vmul.f32 %v187, %v31
    %v257 = vmul.f32 %v192, %v32
    %v258 = vmul.f32 %v197, %v33
    %v259 = vmul.f32 %v202, %v34
    %v260 = vmul.f32 %v207, %v35
    %v261 = vmul.f32 %v212, %v36
    %v262 = vmul.f32 %v217, %v37
    %v263 = vmul.f32 %v222, %v38
    %v264 = vmul.f32 %v227, %v39
    %v265 = vmul.f32 %v232, %v40
    %298 = vrot.lane.b32.xlu0 %v234, 8
    %v299 = vpop.permute.xlu0 %298
    %300 = vrot.lane.b32.xlu0 %v235, 8
    %v301 = vpop.permute.xlu0 %300
    %302 = vrot.lane.b32.xlu0 %v236, 8
    %v303 = vpop.permute.xlu0 %302
    %304 = vrot.lane.b32.xlu0 %v237, 8
    %v305 = vpop.permute.xlu0 %304
    %306 = vrot.lane.b32.xlu0 %v238, 8
    %v307 = vpop.permute.xlu0 %306
    %308 = vrot.lane.b32.xlu0 %v239, 8
    %v309 = vpop.permute.xlu0 %308
    %310 = vrot.lane.b32.xlu0 %v240, 8
    %v311 = vpop.permute.xlu0 %310
    %312 = vrot.lane.b32.xlu0 %v241, 8
    %v313 = vpop.permute.xlu0 %312
    %314 = vrot.lane.b32.xlu0 %v242, 8
    %v315 = vpop.permute.xlu0 %314
    %316 = vrot.lane.b32.xlu0 %v243, 8
    %v317 = vpop.permute.xlu0 %316
    %318 = vrot.lane.b32.xlu0 %v244, 8
    %v319 = vpop.permute.xlu0 %318
    %320 = vrot.lane.b32.xlu0 %v245, 8
    %v321 = vpop.permute.xlu0 %320
    %322 = vrot.lane.b32.xlu0 %v246, 8
    %v323 = vpop.permute.xlu0 %322
    %324 = vrot.lane.b32.xlu0 %v247, 8
    %v325 = vpop.permute.xlu0 %324
    %326 = vrot.lane.b32.xlu0 %v248, 8
    %v327 = vpop.permute.xlu0 %326
    %328 = vrot.lane.b32.xlu0 %v249, 8
    %v329 = vpop.permute.xlu0 %328
    %330 = vrot.lane.b32.xlu0 %v250, 8
    %v331 = vpop.permute.xlu0 %330
    %332 = vrot.lane.b32.xlu0 %v251, 8
    %v333 = vpop.permute.xlu0 %332
    %334 = vrot.lane.b32.xlu0 %v252, 8
    %v335 = vpop.permute.xlu0 %334
    %336 = vrot.lane.b32.xlu0 %v253, 8
    %v337 = vpop.permute.xlu0 %336
    %338 = vrot.lane.b32.xlu0 %v254, 8
    %v339 = vpop.permute.xlu0 %338
    %340 = vrot.lane.b32.xlu0 %v255, 8
    %v341 = vpop.permute.xlu0 %340
    %342 = vrot.lane.b32.xlu0 %v256, 8
    %v343 = vpop.permute.xlu0 %342
    %344 = vrot.lane.b32.xlu0 %v257, 8
    %v345 = vpop.permute.xlu0 %344
    %346 = vrot.lane.b32.xlu0 %v258, 8
    %v347 = vpop.permute.xlu0 %346
    %348 = vrot.lane.b32.xlu0 %v259, 8
    %v349 = vpop.permute.xlu0 %348
    %350 = vrot.lane.b32.xlu0 %v260, 8
    %v351 = vpop.permute.xlu0 %350
    %352 = vrot.lane.b32.xlu0 %v261, 8
    %v353 = vpop.permute.xlu0 %352
    %354 = vrot.lane.b32.xlu0 %v262, 8
    %v355 = vpop.permute.xlu0 %354
    %356 = vrot.lane.b32.xlu0 %v263, 8
    %v357 = vpop.permute.xlu0 %356
    %358 = vrot.lane.b32.xlu0 %v264, 8
    %v359 = vpop.permute.xlu0 %358
    %360 = vrot.lane.b32.xlu0 %v265, 8
    %v361 = vpop.permute.xlu0 %360
    %vm394 = vcmask 130112
    %395 = vst.msk [vmem:[#allocation2] sm:$0xff] %vm394, %v299
    %396 = vst.msk [vmem:[#allocation2 + $0x8] sm:$0xff] %vm394, %v301
    %397 = vst.msk [vmem:[#allocation2 + $0x10] sm:$0xff] %vm394, %v303
    %398 = vst.msk [vmem:[#allocation2 + $0x18] sm:$0xff] %vm394, %v305
    %399 = vst.msk [vmem:[#allocation2 + $0x20] sm:$0xff] %vm394, %v307
    %400 = vst.msk [vmem:[#allocation2 + $0x28] sm:$0xff] %vm394, %v309
    %401 = vst.msk [vmem:[#allocation2 + $0x30] sm:$0xff] %vm394, %v311
    %402 = vst.msk [vmem:[#allocation2 + $0x38] sm:$0xff] %vm394, %v313
    %403 = vst.msk [vmem:[#allocation2 + $0x40] sm:$0xff] %vm394, %v315
    %404 = vst.msk [vmem:[#allocation2 + $0x48] sm:$0xff] %vm394, %v317
    %405 = vst.msk [vmem:[#allocation2 + $0x50] sm:$0xff] %vm394, %v319
    %406 = vst.msk [vmem:[#allocation2 + $0x58] sm:$0xff] %vm394, %v321
    %407 = vst.msk [vmem:[#allocation2 + $0x60] sm:$0xff] %vm394, %v323
    %408 = vst.msk [vmem:[#allocation2 + $0x68] sm:$0xff] %vm394, %v325
    %409 = vst.msk [vmem:[#allocation2 + $0x70] sm:$0xff] %vm394, %v327
    %410 = vst.msk [vmem:[#allocation2 + $0x78] sm:$0xff] %vm394, %v329
    %411 = vst.msk [vmem:[#allocation2 + $0x80] sm:$0xff] %vm394, %v331
    %412 = vst.msk [vmem:[#allocation2 + $0x88] sm:$0xff] %vm394, %v333
    %413 = vst.msk [vmem:[#allocation2 + $0x90] sm:$0xff] %vm394, %v335
    %414 = vst.msk [vmem:[#allocation2 + $0x98] sm:$0xff] %vm394, %v337
    %415 = vst.msk [vmem:[#allocation2 + $0xa0] sm:$0xff] %vm394, %v339
    %416 = vst.msk [vmem:[#allocation2 + $0xa8] sm:$0xff] %vm394, %v341
    %417 = vst.msk [vmem:[#allocation2 + $0xb0] sm:$0xff] %vm394, %v343
    %418 = vst.msk [vmem:[#allocation2 + $0xb8] sm:$0xff] %vm394, %v345
    %419 = vst.msk [vmem:[#allocation2 + $0xc0] sm:$0xff] %vm394, %v347
    %420 = vst.msk [vmem:[#allocation2 + $0xc8] sm:$0xff] %vm394, %v349
    %421 = vst.msk [vmem:[#allocation2 + $0xd0] sm:$0xff] %vm394, %v351
    %422 = vst.msk [vmem:[#allocation2 + $0xd8] sm:$0xff] %vm394, %v353
    %423 = vst.msk [vmem:[#allocation2 + $0xe0] sm:$0xff] %vm394, %v355
    %424 = vst.msk [vmem:[#allocation2 + $0xe8] sm:$0xff] %vm394, %v357
    %425 = vst.msk [vmem:[#allocation2 + $0xf0] sm:$0xff] %vm394, %v359
    %426 = vst.msk [vmem:[#allocation2 + $0xf8] sm:$0xff] %vm394, %v361
    %427 = vset.pattern.permute.xlu0 1
    %428 = vperm.xlu0 %427, %v9
    %v429 = vpop.permute.xlu0 %428
    %431 = vset.pattern.permute.xlu0 1
    %432 = vperm.xlu0 %431, %v10
    %v433 = vpop.permute.xlu0 %432
    %435 = vset.pattern.permute.xlu0 1
    %436 = vperm.xlu0 %435, %v11
    %v437 = vpop.permute.xlu0 %436
    %439 = vset.pattern.permute.xlu0 1
    %440 = vperm.xlu0 %439, %v12
    %v441 = vpop.permute.xlu0 %440
    %443 = vset.pattern.permute.xlu0 1
    %444 = vperm.xlu0 %443, %v13
    %v445 = vpop.permute.xlu0 %444
    %447 = vset.pattern.permute.xlu0 1
    %448 = vperm.xlu0 %447, %v14
    %v449 = vpop.permute.xlu0 %448
    %451 = vset.pattern.permute.xlu0 1
    %452 = vperm.xlu0 %451, %v15
    %v453 = vpop.permute.xlu0 %452
    %455 = vset.pattern.permute.xlu0 1
    %456 = vperm.xlu0 %455, %v16
    %v457 = vpop.permute.xlu0 %456
    %459 = vset.pattern.permute.xlu0 1
    %460 = vperm.xlu0 %459, %v17
    %v461 = vpop.permute.xlu0 %460
    %463 = vset.pattern.permute.xlu0 1
    %464 = vperm.xlu0 %463, %v18
    %v465 = vpop.permute.xlu0 %464
    %467 = vset.pattern.permute.xlu0 1
    %468 = vperm.xlu0 %467, %v19
    %v469 = vpop.permute.xlu0 %468
    %471 = vset.pattern.permute.xlu0 1
    %472 = vperm.xlu0 %471, %v20
    %v473 = vpop.permute.xlu0 %472
    %475 = vset.pattern.permute.xlu0 1
    %476 = vperm.xlu0 %475, %v21
    %v477 = vpop.permute.xlu0 %476
    %479 = vset.pattern.permute.xlu0 1
    %480 = vperm.xlu0 %479, %v22
    %v481 = vpop.permute.xlu0 %480
    %483 = vset.pattern.permute.xlu0 1
    %484 = vperm.xlu0 %483, %v23
    %v485 = vpop.permute.xlu0 %484
    %487 = vset.pattern.permute.xlu0 1
    %488 = vperm.xlu0 %487, %v24
    %v489 = vpop.permute.xlu0 %488
    %491 = vset.pattern.permute.xlu0 1
    %492 = vperm.xlu0 %491, %v25
    %v493 = vpop.permute.xlu0 %492
    %495 = vset.pattern.permute.xlu0 1
    %496 = vperm.xlu0 %495, %v26
    %v497 = vpop.permute.xlu0 %496
    %499 = vset.pattern.permute.xlu0 1
    %500 = vperm.xlu0 %499, %v27
    %v501 = vpop.permute.xlu0 %500
    %503 = vset.pattern.permute.xlu0 1
    %504 = vperm.xlu0 %503, %v28
    %v505 = vpop.permute.xlu0 %504
    %507 = vset.pattern.permute.xlu0 1
    %508 = vperm.xlu0 %507, %v29
    %v509 = vpop.permute.xlu0 %508
    %511 = vset.pattern.permute.xlu0 1
    %512 = vperm.xlu0 %511, %v30
    %v513 = vpop.permute.xlu0 %512
    %515 = vset.pattern.permute.xlu0 1
    %516 = vperm.xlu0 %515, %v31
    %v517 = vpop.permute.xlu0 %516
    %519 = vset.pattern.permute.xlu0 1
    %520 = vperm.xlu0 %519, %v32
    %v521 = vpop.permute.xlu0 %520
    %523 = vset.pattern.permute.xlu0 1
    %524 = vperm.xlu0 %523, %v33
    %v525 = vpop.permute.xlu0 %524
    %527 = vset.pattern.permute.xlu0 1
    %528 = vperm.xlu0 %527, %v34
    %v529 = vpop.permute.xlu0 %528
    %531 = vset.pattern.permute.xlu0 1
    %532 = vperm.xlu0 %531, %v35
    %v533 = vpop.permute.xlu0 %532
    %535 = vset.pattern.permute.xlu0 1
    %536 = vperm.xlu0 %535, %v36
    %v537 = vpop.permute.xlu0 %536
    %539 = vset.pattern.permute.xlu0 1
    %540 = vperm.xlu0 %539, %v37
    %v541 = vpop.permute.xlu0 %540
    %543 = vset.pattern.permute.xlu0 1
    %544 = vperm.xlu0 %543, %v38
    %v545 = vpop.permute.xlu0 %544
    %547 = vset.pattern.permute.xlu0 1
    %548 = vperm.xlu0 %547, %v39
    %v549 = vpop.permute.xlu0 %548
    %551 = vset.pattern.permute.xlu0 1
    %552 = vperm.xlu0 %551, %v40
    %v553 = vpop.permute.xlu0 %552
    %v555 = vmul.f32 %v429, %v9
    %v556 = vmul.f32 %v433, %v10
    %v557 = vmul.f32 %v437, %v11
    %v558 = vmul.f32 %v441, %v12
    %v559 = vmul.f32 %v445, %v13
    %v560 = vmul.f32 %v449, %v14
    %v561 = vmul.f32 %v453, %v15
    %v562 = vmul.f32 %v457, %v16
    %v563 = vmul.f32 %v461, %v17
    %v564 = vmul.f32 %v465, %v18
    %v565 = vmul.f32 %v469, %v19
    %v566 = vmul.f32 %v473, %v20
    %v567 = vmul.f32 %v477, %v21
    %v568 = vmul.f32 %v481, %v22
    %v569 = vmul.f32 %v485, %v23
    %v570 = vmul.f32 %v489, %v24
    %v571 = vmul.f32 %v493, %v25
    %v572 = vmul.f32 %v497, %v26
    %v573 = vmul.f32 %v501, %v27
    %v574 = vmul.f32 %v505, %v28
    %v575 = vmul.f32 %v509, %v29
    %v576 = vmul.f32 %v513, %v30
    %v577 = vmul.f32 %v517, %v31
    %v578 = vmul.f32 %v521, %v32
    %v579 = vmul.f32 %v525, %v33
    %v580 = vmul.f32 %v529, %v34
    %v581 = vmul.f32 %v533, %v35
    %v582 = vmul.f32 %v537, %v36
    %v583 = vmul.f32 %v541, %v37
    %v584 = vmul.f32 %v545, %v38
    %v585 = vmul.f32 %v549, %v39
    %v586 = vmul.f32 %v553, %v40
    %619 = vrot.lane.b32.xlu0 %v555, 15
    %v620 = vpop.permute.xlu0 %619
    %621 = vrot.lane.b32.xlu0 %v556, 15
    %v622 = vpop.permute.xlu0 %621
    %623 = vrot.lane.b32.xlu0 %v557, 15
    %v624 = vpop.permute.xlu0 %623
    %625 = vrot.lane.b32.xlu0 %v558, 15
    %v626 = vpop.permute.xlu0 %625
    %627 = vrot.lane.b32.xlu0 %v559, 15
    %v628 = vpop.permute.xlu0 %627
    %629 = vrot.lane.b32.xlu0 %v560, 15
    %v630 = vpop.permute.xlu0 %629
    %631 = vrot.lane.b32.xlu0 %v561, 15
    %v632 = vpop.permute.xlu0 %631
    %633 = vrot.lane.b32.xlu0 %v562, 15
    %v634 = vpop.permute.xlu0 %633
    %635 = vrot.lane.b32.xlu0 %v563, 15
    %v636 = vpop.permute.xlu0 %635
    %637 = vrot.lane.b32.xlu0 %v564, 15
    %v638 = vpop.permute.xlu0 %637
    %639 = vrot.lane.b32.xlu0 %v565, 15
    %v640 = vpop.permute.xlu0 %639
    %641 = vrot.lane.b32.xlu0 %v566, 15
    %v642 = vpop.permute.xlu0 %641
    %643 = vrot.lane.b32.xlu0 %v567, 15
    %v644 = vpop.permute.xlu0 %643
    %645 = vrot.lane.b32.xlu0 %v568, 15
    %v646 = vpop.permute.xlu0 %645
    %647 = vrot.lane.b32.xlu0 %v569, 15
    %v648 = vpop.permute.xlu0 %647
    %649 = vrot.lane.b32.xlu0 %v570, 15
    %v650 = vpop.permute.xlu0 %649
    %651 = vrot.lane.b32.xlu0 %v571, 15
    %v652 = vpop.permute.xlu0 %651
    %653 = vrot.lane.b32.xlu0 %v572, 15
    %v654 = vpop.permute.xlu0 %653
    %655 = vrot.lane.b32.xlu0 %v573, 15
    %v656 = vpop.permute.xlu0 %655
    %657 = vrot.lane.b32.xlu0 %v574, 15
    %v658 = vpop.permute.xlu0 %657
    %659 = vrot.lane.b32.xlu0 %v575, 15
    %v660 = vpop.permute.xlu0 %659
    %661 = vrot.lane.b32.xlu0 %v576, 15
    %v662 = vpop.permute.xlu0 %661
    %663 = vrot.lane.b32.xlu0 %v577, 15
    %v664 = vpop.permute.xlu0 %663
    %665 = vrot.lane.b32.xlu0 %v578, 15
    %v666 = vpop.permute.xlu0 %665
    %667 = vrot.lane.b32.xlu0 %v579, 15
    %v668 = vpop.permute.xlu0 %667
    %669 = vrot.lane.b32.xlu0 %v580, 15
    %v670 = vpop.permute.xlu0 %669
    %671 = vrot.lane.b32.xlu0 %v581, 15
    %v672 = vpop.permute.xlu0 %671
    %673 = vrot.lane.b32.xlu0 %v582, 15
    %v674 = vpop.permute.xlu0 %673
    %675 = vrot.lane.b32.xlu0 %v583, 15
    %v676 = vpop.permute.xlu0 %675
    %677 = vrot.lane.b32.xlu0 %v584, 15
    %v678 = vpop.permute.xlu0 %677
    %679 = vrot.lane.b32.xlu0 %v585, 15
    %v680 = vpop.permute.xlu0 %679
    %681 = vrot.lane.b32.xlu0 %v586, 15
    %v682 = vpop.permute.xlu0 %681
    %vm715 = vcmask 187520
    %716 = vst.msk [vmem:[#allocation2] sm:$0xff] %vm715, %v620
    %717 = vst.msk [vmem:[#allocation2 + $0x8] sm:$0xff] %vm715, %v622
    %718 = vst.msk [vmem:[#allocation2 + $0x10] sm:$0xff] %vm715, %v624
    %719 = vst.msk [vmem:[#allocation2 + $0x18] sm:$0xff] %vm715, %v626
    %720 = vst.msk [vmem:[#allocation2 + $0x20] sm:$0xff] %vm715, %v628
    %721 = vst.msk [vmem:[#allocation2 + $0x28] sm:$0xff] %vm715, %v630
    %722 = vst.msk [vmem:[#allocation2 + $0x30] sm:$0xff] %vm715, %v632
    %723 = vst.msk [vmem:[#allocation2 + $0x38] sm:$0xff] %vm715, %v634
    %724 = vst.msk [vmem:[#allocation2 + $0x40] sm:$0xff] %vm715, %v636
    %725 = vst.msk [vmem:[#allocation2 + $0x48] sm:$0xff] %vm715, %v638
    %726 = vst.msk [vmem:[#allocation2 + $0x50] sm:$0xff] %vm715, %v640
    %727 = vst.msk [vmem:[#allocation2 + $0x58] sm:$0xff] %vm715, %v642
    %728 = vst.msk [vmem:[#allocation2 + $0x60] sm:$0xff] %vm715, %v644
    %729 = vst.msk [vmem:[#allocation2 + $0x68] sm:$0xff] %vm715, %v646
    %730 = vst.msk [vmem:[#allocation2 + $0x70] sm:$0xff] %vm715, %v648
    %731 = vst.msk [vmem:[#allocation2 + $0x78] sm:$0xff] %vm715, %v650
    %732 = vst.msk [vmem:[#allocation2 + $0x80] sm:$0xff] %vm715, %v652
    %733 = vst.msk [vmem:[#allocation2 + $0x88] sm:$0xff] %vm715, %v654
    %734 = vst.msk [vmem:[#allocation2 + $0x90] sm:$0xff] %vm715, %v656
    %735 = vst.msk [vmem:[#allocation2 + $0x98] sm:$0xff] %vm715, %v658
    %736 = vst.msk [vmem:[#allocation2 + $0xa0] sm:$0xff] %vm715, %v660
    %737 = vst.msk [vmem:[#allocation2 + $0xa8] sm:$0xff] %vm715, %v662
    %738 = vst.msk [vmem:[#allocation2 + $0xb0] sm:$0xff] %vm715, %v664
    %739 = vst.msk [vmem:[#allocation2 + $0xb8] sm:$0xff] %vm715, %v666
    %740 = vst.msk [vmem:[#allocation2 + $0xc0] sm:$0xff] %vm715, %v668
    %741 = vst.msk [vmem:[#allocation2 + $0xc8] sm:$0xff] %vm715, %v670
    %742 = vst.msk [vmem:[#allocation2 + $0xd0] sm:$0xff] %vm715, %v672
    %743 = vst.msk [vmem:[#allocation2 + $0xd8] sm:$0xff] %vm715, %v674
    %744 = vst.msk [vmem:[#allocation2 + $0xe0] sm:$0xff] %vm715, %v676
    %745 = vst.msk [vmem:[#allocation2 + $0xe8] sm:$0xff] %vm715, %v678
    %746 = vst.msk [vmem:[#allocation2 + $0xf0] sm:$0xff] %vm715, %v680
    %747 = vst.msk [vmem:[#allocation2 + $0xf8] sm:$0xff] %vm715, %v682
    %748 = vset.pattern.permute.xlu0 2
    %749 = vperm.xlu0 %748, %v9
    %v750 = vpop.permute.xlu0 %749
    %752 = vset.pattern.permute.xlu0 2
    %753 = vperm.xlu0 %752, %v10
    %v754 = vpop.permute.xlu0 %753
    %756 = vset.pattern.permute.xlu0 2
    %757 = vperm.xlu0 %756, %v11
    %v758 = vpop.permute.xlu0 %757
    %760 = vset.pattern.permute.xlu0 2
    %761 = vperm.xlu0 %760, %v12
    %v762 = vpop.permute.xlu0 %761
    %764 = vset.pattern.permute.xlu0 2
    %765 = vperm.xlu0 %764, %v13
    %v766 = vpop.permute.xlu0 %765
    %768 = vset.pattern.permute.xlu0 2
    %769 = vperm.xlu0 %768, %v14
    %v770 = vpop.permute.xlu0 %769
    %772 = vset.pattern.permute.xlu0 2
    %773 = vperm.xlu0 %772, %v15
    %v774 = vpop.permute.xlu0 %773
    %776 = vset.pattern.permute.xlu0 2
    %777 = vperm.xlu0 %776, %v16
    %v778 = vpop.permute.xlu0 %777
    %780 = vset.pattern.permute.xlu0 2
    %781 = vperm.xlu0 %780, %v17
    %v782 = vpop.permute.xlu0 %781
    %784 = vset.pattern.permute.xlu0 2
    %785 = vperm.xlu0 %784, %v18
    %v786 = vpop.permute.xlu0 %785
    %788 = vset.pattern.permute.xlu0 2
    %789 = vperm.xlu0 %788, %v19
    %v790 = vpop.permute.xlu0 %789
    %792 = vset.pattern.permute.xlu0 2
    %793 = vperm.xlu0 %792, %v20
    %v794 = vpop.permute.xlu0 %793
    %796 = vset.pattern.permute.xlu0 2
    %797 = vperm.xlu0 %796, %v21
    %v798 = vpop.permute.xlu0 %797
    %800 = vset.pattern.permute.xlu0 2
    %801 = vperm.xlu0 %800, %v22
    %v802 = vpop.permute.xlu0 %801
    %804 = vset.pattern.permute.xlu0 2
    %805 = vperm.xlu0 %804, %v23
    %v806 = vpop.permute.xlu0 %805
    %808 = vset.pattern.permute.xlu0 2
    %809 = vperm.xlu0 %808, %v24
    %v810 = vpop.permute.xlu0 %809
    %812 = vset.pattern.permute.xlu0 2
    %813 = vperm.xlu0 %812, %v25
    %v814 = vpop.permute.xlu0 %813
    %816 = vset.pattern.permute.xlu0 2
    %817 = vperm.xlu0 %816, %v26
    %v818 = vpop.permute.xlu0 %817
    %820 = vset.pattern.permute.xlu0 2
    %821 = vperm.xlu0 %820, %v27
    %v822 = vpop.permute.xlu0 %821
    %824 = vset.pattern.permute.xlu0 2
    %825 = vperm.xlu0 %824, %v28
    %v826 = vpop.permute.xlu0 %825
    %828 = vset.pattern.permute.xlu0 2
    %829 = vperm.xlu0 %828, %v29
    %v830 = vpop.permute.xlu0 %829
    %832 = vset.pattern.permute.xlu0 2
    %833 = vperm.xlu0 %832, %v30
    %v834 = vpop.permute.xlu0 %833
    %836 = vset.pattern.permute.xlu0 2
    %837 = vperm.xlu0 %836, %v31
    %v838 = vpop.permute.xlu0 %837
    %840 = vset.pattern.permute.xlu0 2
    %841 = vperm.xlu0 %840, %v32
    %v842 = vpop.permute.xlu0 %841
    %844 = vset.pattern.permute.xlu0 2
    %845 = vperm.xlu0 %844, %v33
    %v846 = vpop.permute.xlu0 %845
    %848 = vset.pattern.permute.xlu0 2
    %849 = vperm.xlu0 %848, %v34
    %v850 = vpop.permute.xlu0 %849
    %852 = vset.pattern.permute.xlu0 2
    %853 = vperm.xlu0 %852, %v35
    %v854 = vpop.permute.xlu0 %853
    %856 = vset.pattern.permute.xlu0 2
    %857 = vperm.xlu0 %856, %v36
    %v858 = vpop.permute.xlu0 %857
    %860 = vset.pattern.permute.xlu0 2
    %861 = vperm.xlu0 %860, %v37
    %v862 = vpop.permute.xlu0 %861
    %864 = vset.pattern.permute.xlu0 2
    %865 = vperm.xlu0 %864, %v38
    %v866 = vpop.permute.xlu0 %865
    %868 = vset.pattern.permute.xlu0 2
    %869 = vperm.xlu0 %868, %v39
    %v870 = vpop.permute.xlu0 %869
    %872 = vset.pattern.permute.xlu0 2
    %873 = vperm.xlu0 %872, %v40
    %v874 = vpop.permute.xlu0 %873
    %v876 = vmul.f32 %v750, %v9
    %v877 = vmul.f32 %v754, %v10
    %v878 = vmul.f32 %v758, %v11
    %v879 = vmul.f32 %v762, %v12
    %v880 = vmul.f32 %v766, %v13
    %v881 = vmul.f32 %v770, %v14
    %v882 = vmul.f32 %v774, %v15
    %v883 = vmul.f32 %v778, %v16
    %v884 = vmul.f32 %v782, %v17
    %v885 = vmul.f32 %v786, %v18
    %v886 = vmul.f32 %v790, %v19
    %v887 = vmul.f32 %v794, %v20
    %v888 = vmul.f32 %v798, %v21
    %v889 = vmul.f32 %v802, %v22
    %v890 = vmul.f32 %v806, %v23
    %v891 = vmul.f32 %v810, %v24
    %v892 = vmul.f32 %v814, %v25
    %v893 = vmul.f32 %v818, %v26
    %v894 = vmul.f32 %v822, %v27
    %v895 = vmul.f32 %v826, %v28
    %v896 = vmul.f32 %v830, %v29
    %v897 = vmul.f32 %v834, %v30
    %v898 = vmul.f32 %v838, %v31
    %v899 = vmul.f32 %v842, %v32
    %v900 = vmul.f32 %v846, %v33
    %v901 = vmul.f32 %v850, %v34
    %v902 = vmul.f32 %v854, %v35
    %v903 = vmul.f32 %v858, %v36
    %v904 = vmul.f32 %v862, %v37
    %v905 = vmul.f32 %v866, %v38
    %v906 = vmul.f32 %v870, %v39
    %v907 = vmul.f32 %v874, %v40
    %940 = vrot.lane.b32.xlu0 %v876, 21
    %v941 = vpop.permute.xlu0 %940
    %942 = vrot.lane.b32.xlu0 %v877, 21
    %v943 = vpop.permute.xlu0 %942
    %944 = vrot.lane.b32.xlu0 %v878, 21
    %v945 = vpop.permute.xlu0 %944
    %946 = vrot.lane.b32.xlu0 %v879, 21
    %v947 = vpop.permute.xlu0 %946
    %948 = vrot.lane.b32.xlu0 %v880, 21
    %v949 = vpop.permute.xlu0 %948
    %950 = vrot.lane.b32.xlu0 %v881, 21
    %v951 = vpop.permute.xlu0 %950
    %952 = vrot.lane.b32.xlu0 %v882, 21
    %v953 = vpop.permute.xlu0 %952
    %954 = vrot.lane.b32.xlu0 %v883, 21
    %v955 = vpop.permute.xlu0 %954
    %956 = vrot.lane.b32.xlu0 %v884, 21
    %v957 = vpop.permute.xlu0 %956
    %958 = vrot.lane.b32.xlu0 %v885, 21
    %v959 = vpop.permute.xlu0 %958
    %960 = vrot.lane.b32.xlu0 %v886, 21
    %v961 = vpop.permute.xlu0 %960
    %962 = vrot.lane.b32.xlu0 %v887, 21
    %v963 = vpop.permute.xlu0 %962
    %964 = vrot.lane.b32.xlu0 %v888, 21
    %v965 = vpop.permute.xlu0 %964
    %966 = vrot.lane.b32.xlu0 %v889, 21
    %v967 = vpop.permute.xlu0 %966
    %968 = vrot.lane.b32.xlu0 %v890, 21
    %v969 = vpop.permute.xlu0 %968
    %970 = vrot.lane.b32.xlu0 %v891, 21
    %v971 = vpop.permute.xlu0 %970
    %972 = vrot.lane.b32.xlu0 %v892, 21
    %v973 = vpop.permute.xlu0 %972
    %974 = vrot.lane.b32.xlu0 %v893, 21
    %v975 = vpop.permute.xlu0 %974
    %976 = vrot.lane.b32.xlu0 %v894, 21
    %v977 = vpop.permute.xlu0 %976
    %978 = vrot.lane.b32.xlu0 %v895, 21
    %v979 = vpop.permute.xlu0 %978
    %980 = vrot.lane.b32.xlu0 %v896, 21
    %v981 = vpop.permute.xlu0 %980
    %982 = vrot.lane.b32.xlu0 %v897, 21
    %v983 = vpop.permute.xlu0 %982
    %984 = vrot.lane.b32.xlu0 %v898, 21
    %v985 = vpop.permute.xlu0 %984
    %986 = vrot.lane.b32.xlu0 %v899, 21
    %v987 = vpop.permute.xlu0 %986
    %988 = vrot.lane.b32.xlu0 %v900, 21
    %v989 = vpop.permute.xlu0 %988
    %990 = vrot.lane.b32.xlu0 %v901, 21
    %v991 = vpop.permute.xlu0 %990
    %992 = vrot.lane.b32.xlu0 %v902, 21
    %v993 = vpop.permute.xlu0 %992
    %994 = vrot.lane.b32.xlu0 %v903, 21
    %v995 = vpop.permute.xlu0 %994
    %996 = vrot.lane.b32.xlu0 %v904, 21
    %v997 = vpop.permute.xlu0 %996
    %998 = vrot.lane.b32.xlu0 %v905, 21
    %v999 = vpop.permute.xlu0 %998
    %1000 = vrot.lane.b32.xlu0 %v906, 21
    %v1001 = vpop.permute.xlu0 %1000
    %1002 = vrot.lane.b32.xlu0 %v907, 21
    %v1003 = vpop.permute.xlu0 %1002
    %vm1036 = vcmask 236728
    %1037 = vst.msk [vmem:[#allocation2] sm:$0xff] %vm1036, %v941
    %1038 = vst.msk [vmem:[#allocation2 + $0x8] sm:$0xff] %vm1036, %v943
    %1039 = vst.msk [vmem:[#allocation2 + $0x10] sm:$0xff] %vm1036, %v945
    %1040 = vst.msk [vmem:[#allocation2 + $0x18] sm:$0xff] %vm1036, %v947
    %1041 = vst.msk [vmem:[#allocation2 + $0x20] sm:$0xff] %vm1036, %v949
    %1042 = vst.msk [vmem:[#allocation2 + $0x28] sm:$0xff] %vm1036, %v951
    %1043 = vst.msk [vmem:[#allocation2 + $0x30] sm:$0xff] %vm1036, %v953
    %1044 = vst.msk [vmem:[#allocation2 + $0x38] sm:$0xff] %vm1036, %v955
    %1045 = vst.msk [vmem:[#allocation2 + $0x40] sm:$0xff] %vm1036, %v957
    %1046 = vst.msk [vmem:[#allocation2 + $0x48] sm:$0xff] %vm1036, %v959
    %1047 = vst.msk [vmem:[#allocation2 + $0x50] sm:$0xff] %vm1036, %v961
    %1048 = vst.msk [vmem:[#allocation2 + $0x58] sm:$0xff] %vm1036, %v963
    %1049 = vst.msk [vmem:[#allocation2 + $0x60] sm:$0xff] %vm1036, %v965
    %1050 = vst.msk [vmem:[#allocation2 + $0x68] sm:$0xff] %vm1036, %v967
    %1051 = vst.msk [vmem:[#allocation2 + $0x70] sm:$0xff] %vm1036, %v969
    %1052 = vst.msk [vmem:[#allocation2 + $0x78] sm:$0xff] %vm1036, %v971
    %1053 = vst.msk [vmem:[#allocation2 + $0x80] sm:$0xff] %vm1036, %v973
    %1054 = vst.msk [vmem:[#allocation2 + $0x88] sm:$0xff] %vm1036, %v975
    %1055 = vst.msk [vmem:[#allocation2 + $0x90] sm:$0xff] %vm1036, %v977
    %1056 = vst.msk [vmem:[#allocation2 + $0x98] sm:$0xff] %vm1036, %v979
    %1057 = vst.msk [vmem:[#allocation2 + $0xa0] sm:$0xff] %vm1036, %v981
    %1058 = vst.msk [vmem:[#allocation2 + $0xa8] sm:$0xff] %vm1036, %v983
    %1059 = vst.msk [vmem:[#allocation2 + $0xb0] sm:$0xff] %vm1036, %v985
    %1060 = vst.msk [vmem:[#allocation2 + $0xb8] sm:$0xff] %vm1036, %v987
    %1061 = vst.msk [vmem:[#allocation2 + $0xc0] sm:$0xff] %vm1036, %v989
    %1062 = vst.msk [vmem:[#allocation2 + $0xc8] sm:$0xff] %vm1036, %v991
    %1063 = vst.msk [vmem:[#allocation2 + $0xd0] sm:$0xff] %vm1036, %v993
    %1064 = vst.msk [vmem:[#allocation2 + $0xd8] sm:$0xff] %vm1036, %v995
    %1065 = vst.msk [vmem:[#allocation2 + $0xe0] sm:$0xff] %vm1036, %v997
    %1066 = vst.msk [vmem:[#allocation2 + $0xe8] sm:$0xff] %vm1036, %v999
    %1067 = vst.msk [vmem:[#allocation2 + $0xf0] sm:$0xff] %vm1036, %v1001
    %1068 = vst.msk [vmem:[#allocation2 + $0xf8] sm:$0xff] %vm1036, %v1003
    %1069 = vset.pattern.permute.xlu0 3
    %1070 = vperm.xlu0 %1069, %v9
    %v1071 = vpop.permute.xlu0 %1070
    %1073 = vset.pattern.permute.xlu0 3
    %1074 = vperm.xlu0 %1073, %v10
    %v1075 = vpop.permute.xlu0 %1074
    %1077 = vset.pattern.permute.xlu0 3
    %1078 = vperm.xlu0 %1077, %v11
    %v1079 = vpop.permute.xlu0 %1078
    %1081 = vset.pattern.permute.xlu0 3
    %1082 = vperm.xlu0 %1081, %v12
    %v1083 = vpop.permute.xlu0 %1082
    %1085 = vset.pattern.permute.xlu0 3
    %1086 = vperm.xlu0 %1085, %v13
    %v1087 = vpop.permute.xlu0 %1086
    %1089 = vset.pattern.permute.xlu0 3
    %1090 = vperm.xlu0 %1089, %v14
    %v1091 = vpop.permute.xlu0 %1090
    %1093 = vset.pattern.permute.xlu0 3
    %1094 = vperm.xlu0 %1093, %v15
    %v1095 = vpop.permute.xlu0 %1094
    %1097 = vset.pattern.permute.xlu0 3
    %1098 = vperm.xlu0 %1097, %v16
    %v1099 = vpop.permute.xlu0 %1098
    %1101 = vset.pattern.permute.xlu0 3
    %1102 = vperm.xlu0 %1101, %v17
    %v1103 = vpop.permute.xlu0 %1102
    %1105 = vset.pattern.permute.xlu0 3
    %1106 = vperm.xlu0 %1105, %v18
    %v1107 = vpop.permute.xlu0 %1106
    %1109 = vset.pattern.permute.xlu0 3
    %1110 = vperm.xlu0 %1109, %v19
    %v1111 = vpop.permute.xlu0 %1110
    %1113 = vset.pattern.permute.xlu0 3
    %1114 = vperm.xlu0 %1113, %v20
    %v1115 = vpop.permute.xlu0 %1114
    %1117 = vset.pattern.permute.xlu0 3
    %1118 = vperm.xlu0 %1117, %v21
    %v1119 = vpop.permute.xlu0 %1118
    %1121 = vset.pattern.permute.xlu0 3
    %1122 = vperm.xlu0 %1121, %v22
    %v1123 = vpop.permute.xlu0 %1122
    %1125 = vset.pattern.permute.xlu0 3
    %1126 = vperm.xlu0 %1125, %v23
    %v1127 = vpop.permute.xlu0 %1126
    %1129 = vset.pattern.permute.xlu0 3
    %1130 = vperm.xlu0 %1129, %v24
    %v1131 = vpop.permute.xlu0 %1130
    %1133 = vset.pattern.permute.xlu0 3
    %1134 = vperm.xlu0 %1133, %v25
    %v1135 = vpop.permute.xlu0 %1134
    %1137 = vset.pattern.permute.xlu0 3
    %1138 = vperm.xlu0 %1137, %v26
    %v1139 = vpop.permute.xlu0 %1138
    %1141 = vset.pattern.permute.xlu0 3
    %1142 = vperm.xlu0 %1141, %v27
    %v1143 = vpop.permute.xlu0 %1142
    %1145 = vset.pattern.permute.xlu0 3
    %1146 = vperm.xlu0 %1145, %v28
    %v1147 = vpop.permute.xlu0 %1146
    %1149 = vset.pattern.permute.xlu0 3
    %1150 = vperm.xlu0 %1149, %v29
    %v1151 = vpop.permute.xlu0 %1150
    %1153 = vset.pattern.permute.xlu0 3
    %1154 = vperm.xlu0 %1153, %v30
    %v1155 = vpop.permute.xlu0 %1154
    %1157 = vset.pattern.permute.xlu0 3
    %1158 = vperm.xlu0 %1157, %v31
    %v1159 = vpop.permute.xlu0 %1158
    %1161 = vset.pattern.permute.xlu0 3
    %1162 = vperm.xlu0 %1161, %v32
    %v1163 = vpop.permute.xlu0 %1162
    %1165 = vset.pattern.permute.xlu0 3
    %1166 = vperm.xlu0 %1165, %v33
    %v1167 = vpop.permute.xlu0 %1166
    %1169 = vset.pattern.permute.xlu0 3
    %1170 = vperm.xlu0 %1169, %v34
    %v1171 = vpop.permute.xlu0 %1170
    %1173 = vset.pattern.permute.xlu0 3
    %1174 = vperm.xlu0 %1173, %v35
    %v1175 = vpop.permute.xlu0 %1174
    %1177 = vset.pattern.permute.xlu0 3
    %1178 = vperm.xlu0 %1177, %v36
    %v1179 = vpop.permute.xlu0 %1178
    %1181 = vset.pattern.permute.xlu0 3
    %1182 = vperm.xlu0 %1181, %v37
    %v1183 = vpop.permute.xlu0 %1182
    %1185 = vset.pattern.permute.xlu0 3
    %1186 = vperm.xlu0 %1185, %v38
    %v1187 = vpop.permute.xlu0 %1186
    %1189 = vset.pattern.permute.xlu0 3
    %1190 = vperm.xlu0 %1189, %v39
    %v1191 = vpop.permute.xlu0 %1190
    %1193 = vset.pattern.permute.xlu0 3
    %1194 = vperm.xlu0 %1193, %v40
    %v1195 = vpop.permute.xlu0 %1194
    %v1197 = vmul.f32 %v1071, %v9
    %v1198 = vmul.f32 %v1075, %v10
    %v1199 = vmul.f32 %v1079, %v11
    %v1200 = vmul.f32 %v1083, %v12
    %v1201 = vmul.f32 %v1087, %v13
    %v1202 = vmul.f32 %v1091, %v14
    %v1203 = vmul.f32 %v1095, %v15
    %v1204 = vmul.f32 %v1099, %v16
    %v1205 = vmul.f32 %v1103, %v17
    %v1206 = vmul.f32 %v1107, %v18
    %v1207 = vmul.f32 %v1111, %v19
    %v1208 = vmul.f32 %v1115, %v20
    %v1209 = vmul.f32 %v1119, %v21
    %v1210 = vmul.f32 %v1123, %v22
    %v1211 = vmul.f32 %v1127, %v23
    %v1212 = vmul.f32 %v1131, %v24
    %v1213 = vmul.f32 %v1135, %v25
    %v1214 = vmul.f32 %v1139, %v26
    %v1215 = vmul.f32 %v1143, %v27
    %v1216 = vmul.f32 %v1147, %v28
    %v1217 = vmul.f32 %v1151, %v29
    %v1218 = vmul.f32 %v1155, %v30
    %v1219 = vmul.f32 %v1159, %v31
    %v1220 = vmul.f32 %v1163, %v32
    %v1221 = vmul.f32 %v1167, %v33
    %v1222 = vmul.f32 %v1171, %v34
    %v1223 = vmul.f32 %v1175, %v35
    %v1224 = vmul.f32 %v1179, %v36
    %v1225 = vmul.f32 %v1183, %v37
    %v1226 = vmul.f32 %v1187, %v38
    %v1227 = vmul.f32 %v1191, %v39
    %v1228 = vmul.f32 %v1195, %v40
    %1261 = vrot.lane.b32.xlu0 %v1197, 26
    %v1262 = vpop.permute.xlu0 %1261
    %1263 = vrot.lane.b32.xlu0 %v1198, 26
    %v1264 = vpop.permute.xlu0 %1263
    %1265 = vrot.lane.b32.xlu0 %v1199, 26
    %v1266 = vpop.permute.xlu0 %1265
    %1267 = vrot.lane.b32.xlu0 %v1200, 26
    %v1268 = vpop.permute.xlu0 %1267
    %1269 = vrot.lane.b32.xlu0 %v1201, 26
    %v1270 = vpop.permute.xlu0 %1269
    %1271 = vrot.lane.b32.xlu0 %v1202, 26
    %v1272 = vpop.permute.xlu0 %1271
    %1273 = vrot.lane.b32.xlu0 %v1203, 26
    %v1274 = vpop.permute.xlu0 %1273
    %1275 = vrot.lane.b32.xlu0 %v1204, 26
    %v1276 = vpop.permute.xlu0 %1275
    %1277 = vrot.lane.b32.xlu0 %v1205, 26
    %v1278 = vpop.permute.xlu0 %1277
    %1279 = vrot.lane.b32.xlu0 %v1206, 26
    %v1280 = vpop.permute.xlu0 %1279
    %1281 = vrot.lane.b32.xlu0 %v1207, 26
    %v1282 = vpop.permute.xlu0 %1281
    %1283 = vrot.lane.b32.xlu0 %v1208, 26
    %v1284 = vpop.permute.xlu0 %1283
    %1285 = vrot.lane.b32.xlu0 %v1209, 26
    %v1286 = vpop.permute.xlu0 %1285
    %1287 = vrot.lane.b32.xlu0 %v1210, 26
    %v1288 = vpop.permute.xlu0 %1287
    %1289 = vrot.lane.b32.xlu0 %v1211, 26
    %v1290 = vpop.permute.xlu0 %1289
    %1291 = vrot.lane.b32.xlu0 %v1212, 26
    %v1292 = vpop.permute.xlu0 %1291
    %1293 = vrot.lane.b32.xlu0 %v1213, 26
    %v1294 = vpop.permute.xlu0 %1293
    %1295 = vrot.lane.b32.xlu0 %v1214, 26
    %v1296 = vpop.permute.xlu0 %1295
    %1297 = vrot.lane.b32.xlu0 %v1215, 26
    %v1298 = vpop.permute.xlu0 %1297
    %1299 = vrot.lane.b32.xlu0 %v1216, 26
    %v1300 = vpop.permute.xlu0 %1299
    %1301 = vrot.lane.b32.xlu0 %v1217, 26
    %v1302 = vpop.permute.xlu0 %1301
    %1303 = vrot.lane.b32.xlu0 %v1218, 26
    %v1304 = vpop.permute.xlu0 %1303
    %1305 = vrot.lane.b32.xlu0 %v1219, 26
    %v1306 = vpop.permute.xlu0 %1305
    %1307 = vrot.lane.b32.xlu0 %v1220, 26
    %v1308 = vpop.permute.xlu0 %1307
    %1309 = vrot.lane.b32.xlu0 %v1221, 26
    %v1310 = vpop.permute.xlu0 %1309
    %1311 = vrot.lane.b32.xlu0 %v1222, 26
    %v1312 = vpop.permute.xlu0 %1311
    %1313 = vrot.lane.b32.xlu0 %v1223, 26
    %v1314 = vpop.permute.xlu0 %1313
    %1315 = vrot.lane.b32.xlu0 %v1224, 26
    %v1316 = vpop.permute.xlu0 %1315
    %1317 = vrot.lane.b32.xlu0 %v1225, 26
    %v1318 = vpop.permute.xlu0 %1317
    %1319 = vrot.lane.b32.xlu0 %v1226, 26
    %v1320 = vpop.permute.xlu0 %1319
    %1321 = vrot.lane.b32.xlu0 %v1227, 26
    %v1322 = vpop.permute.xlu0 %1321
    %1323 = vrot.lane.b32.xlu0 %v1228, 26
    %v1324 = vpop.permute.xlu0 %1323
    %vm1357 = vcmask 277736
    %1358 = vst.msk [vmem:[#allocation2] sm:$0xff] %vm1357, %v1262
    %1359 = vst.msk [vmem:[#allocation2 + $0x8] sm:$0xff] %vm1357, %v1264
    %1360 = vst.msk [vmem:[#allocation2 + $0x10] sm:$0xff] %vm1357, %v1266
    %1361 = vst.msk [vmem:[#allocation2 + $0x18] sm:$0xff] %vm1357, %v1268
    %1362 = vst.msk [vmem:[#allocation2 + $0x20] sm:$0xff] %vm1357, %v1270
    %1363 = vst.msk [vmem:[#allocation2 + $0x28] sm:$0xff] %vm1357, %v1272
    %1364 = vst.msk [vmem:[#allocation2 + $0x30] sm:$0xff] %vm1357, %v1274
    %1365 = vst.msk [vmem:[#allocation2 + $0x38] sm:$0xff] %vm1357, %v1276
    %1366 = vst.msk [vmem:[#allocation2 + $0x40] sm:$0xff] %vm1357, %v1278
    %1367 = vst.msk [vmem:[#allocation2 + $0x48] sm:$0xff] %vm1357, %v1280
    %1368 = vst.msk [vmem:[#allocation2 + $0x50] sm:$0xff] %vm1357, %v1282
    %1369 = vst.msk [vmem:[#allocation2 + $0x58] sm:$0xff] %vm1357, %v1284
    %1370 = vst.msk [vmem:[#allocation2 + $0x60] sm:$0xff] %vm1357, %v1286
    %1371 = vst.msk [vmem:[#allocation2 + $0x68] sm:$0xff] %vm1357, %v1288
    %1372 = vst.msk [vmem:[#allocation2 + $0x70] sm:$0xff] %vm1357, %v1290
    %1373 = vst.msk [vmem:[#allocation2 + $0x78] sm:$0xff] %vm1357, %v1292
    %1374 = vst.msk [vmem:[#allocation2 + $0x80] sm:$0xff] %vm1357, %v1294
    %1375 = vst.msk [vmem:[#allocation2 + $0x88] sm:$0xff] %vm1357, %v1296
    %1376 = vst.msk [vmem:[#allocation2 + $0x90] sm:$0xff] %vm1357, %v1298
    %1377 = vst.msk [vmem:[#allocation2 + $0x98] sm:$0xff] %vm1357, %v1300
    %1378 = vst.msk [vmem:[#allocation2 + $0xa0] sm:$0xff] %vm1357, %v1302
    %1379 = vst.msk [vmem:[#allocation2 + $0xa8] sm:$0xff] %vm1357, %v1304
    %1380 = vst.msk [vmem:[#allocation2 + $0xb0] sm:$0xff] %vm1357, %v1306
    %1381 = vst.msk [vmem:[#allocation2 + $0xb8] sm:$0xff] %vm1357, %v1308
    %1382 = vst.msk [vmem:[#allocation2 + $0xc0] sm:$0xff] %vm1357, %v1310
    %1383 = vst.msk [vmem:[#allocation2 + $0xc8] sm:$0xff] %vm1357, %v1312
    %1384 = vst.msk [vmem:[#allocation2 + $0xd0] sm:$0xff] %vm1357, %v1314
    %1385 = vst.msk [vmem:[#allocation2 + $0xd8] sm:$0xff] %vm1357, %v1316
    %1386 = vst.msk [vmem:[#allocation2 + $0xe0] sm:$0xff] %vm1357, %v1318
    %1387 = vst.msk [vmem:[#allocation2 + $0xe8] sm:$0xff] %vm1357, %v1320
    %1388 = vst.msk [vmem:[#allocation2 + $0xf0] sm:$0xff] %vm1357, %v1322
    %1389 = vst.msk [vmem:[#allocation2 + $0xf8] sm:$0xff] %vm1357, %v1324
    %1390 = vset.pattern.permute.xlu0 4
    %1391 = vperm.xlu0 %1390, %v9
    %v1392 = vpop.permute.xlu0 %1391
    %1394 = vset.pattern.permute.xlu0 4
    %1395 = vperm.xlu0 %1394, %v10
    %v1396 = vpop.permute.xlu0 %1395
    %1398 = vset.pattern.permute.xlu0 4
    %1399 = vperm.xlu0 %1398, %v11
    %v1400 = vpop.permute.xlu0 %1399
    %1402 = vset.pattern.permute.xlu0 4
    %1403 = vperm.xlu0 %1402, %v12
    %v1404 = vpop.permute.xlu0 %1403
    %1406 = vset.pattern.permute.xlu0 4
    %1407 = vperm.xlu0 %1406, %v13
    %v1408 = vpop.permute.xlu0 %1407
    %1410 = vset.pattern.permute.xlu0 4
    %1411 = vperm.xlu0 %1410, %v14
    %v1412 = vpop.permute.xlu0 %1411
    %1414 = vset.pattern.permute.xlu0 4
    %1415 = vperm.xlu0 %1414, %v15
    %v1416 = vpop.permute.xlu0 %1415
    %1418 = vset.pattern.permute.xlu0 4
    %1419 = vperm.xlu0 %1418, %v16
    %v1420 = vpop.permute.xlu0 %1419
    %1422 = vset.pattern.permute.xlu0 4
    %1423 = vperm.xlu0 %1422, %v17
    %v1424 = vpop.permute.xlu0 %1423
    %1426 = vset.pattern.permute.xlu0 4
    %1427 = vperm.xlu0 %1426, %v18
    %v1428 = vpop.permute.xlu0 %1427
    %1430 = vset.pattern.permute.xlu0 4
    %1431 = vperm.xlu0 %1430, %v19
    %v1432 = vpop.permute.xlu0 %1431
    %1434 = vset.pattern.permute.xlu0 4
    %1435 = vperm.xlu0 %1434, %v20
    %v1436 = vpop.permute.xlu0 %1435
    %1438 = vset.pattern.permute.xlu0 4
    %1439 = vperm.xlu0 %1438, %v21
    %v1440 = vpop.permute.xlu0 %1439
    %1442 = vset.pattern.permute.xlu0 4
    %1443 = vperm.xlu0 %1442, %v22
    %v1444 = vpop.permute.xlu0 %1443
    %1446 = vset.pattern.permute.xlu0 4
    %1447 = vperm.xlu0 %1446, %v23
    %v1448 = vpop.permute.xlu0 %1447
    %1450 = vset.pattern.permute.xlu0 4
    %1451 = vperm.xlu0 %1450, %v24
    %v1452 = vpop.permute.xlu0 %1451
    %1454 = vset.pattern.permute.xlu0 4
    %1455 = vperm.xlu0 %1454, %v25
    %v1456 = vpop.permute.xlu0 %1455
    %1458 = vset.pattern.permute.xlu0 4
    %1459 = vperm.xlu0 %1458, %v26
    %v1460 = vpop.permute.xlu0 %1459
    %1462 = vset.pattern.permute.xlu0 4
    %1463 = vperm.xlu0 %1462, %v27
    %v1464 = vpop.permute.xlu0 %1463
    %1466 = vset.pattern.permute.xlu0 4
    %1467 = vperm.xlu0 %1466, %v28
    %v1468 = vpop.permute.xlu0 %1467
    %1470 = vset.pattern.permute.xlu0 4
    %1471 = vperm.xlu0 %1470, %v29
    %v1472 = vpop.permute.xlu0 %1471
    %1474 = vset.pattern.permute.xlu0 4
    %1475 = vperm.xlu0 %1474, %v30
    %v1476 = vpop.permute.xlu0 %1475
    %1478 = vset.pattern.permute.xlu0 4
    %1479 = vperm.xlu0 %1478, %v31
    %v1480 = vpop.permute.xlu0 %1479
    %1482 = vset.pattern.permute.xlu0 4
    %1483 = vperm.xlu0 %1482, %v32
    %v1484 = vpop.permute.xlu0 %1483
    %1486 = vset.pattern.permute.xlu0 4
    %1487 = vperm.xlu0 %1486, %v33
    %v1488 = vpop.permute.xlu0 %1487
    %1490 = vset.pattern.permute.xlu0 4
    %1491 = vperm.xlu0 %1490, %v34
    %v1492 = vpop.permute.xlu0 %1491
    %1494 = vset.pattern.permute.xlu0 4
    %1495 = vperm.xlu0 %1494, %v35
    %v1496 = vpop.permute.xlu0 %1495
    %1498 = vset.pattern.permute.xlu0 4
    %1499 = vperm.xlu0 %1498, %v36
    %v1500 = vpop.permute.xlu0 %1499
    %1502 = vset.pattern.permute.xlu0 4
    %1503 = vperm.xlu0 %1502, %v37
    %v1504 = vpop.permute.xlu0 %1503
    %1506 = vset.pattern.permute.xlu0 4
    %1507 = vperm.xlu0 %1506, %v38
    %v1508 = vpop.permute.xlu0 %1507
    %1510 = vset.pattern.permute.xlu0 4
    %1511 = vperm.xlu0 %1510, %v39
    %v1512 = vpop.permute.xlu0 %1511
    %1514 = vset.pattern.permute.xlu0 4
    %1515 = vperm.xlu0 %1514, %v40
    %v1516 = vpop.permute.xlu0 %1515
    %v1518 = vmul.f32 %v1392, %v9
    %v1519 = vmul.f32 %v1396, %v10
    %v1520 = vmul.f32 %v1400, %v11
    %v1521 = vmul.f32 %v1404, %v12
    %v1522 = vmul.f32 %v1408, %v13
    %v1523 = vmul.f32 %v1412, %v14
    %v1524 = vmul.f32 %v1416, %v15
    %v1525 = vmul.f32 %v1420, %v16
    %v1526 = vmul.f32 %v1424, %v17
    %v1527 = vmul.f32 %v1428, %v18
    %v1528 = vmul.f32 %v1432, %v19
    %v1529 = vmul.f32 %v1436, %v20
    %v1530 = vmul.f32 %v1440, %v21
    %v1531 = vmul.f32 %v1444, %v22
    %v1532 = vmul.f32 %v1448, %v23
    %v1533 = vmul.f32 %v1452, %v24
    %v1534 = vmul.f32 %v1456, %v25
    %v1535 = vmul.f32 %v1460, %v26
    %v1536 = vmul.f32 %v1464, %v27
    %v1537 = vmul.f32 %v1468, %v28
    %v1538 = vmul.f32 %v1472, %v29
    %v1539 = vmul.f32 %v1476, %v30
    %v1540 = vmul.f32 %v1480, %v31
    %v1541 = vmul.f32 %v1484, %v32
    %v1542 = vmul.f32 %v1488, %v33
    %v1543 = vmul.f32 %v1492, %v34
    %v1544 = vmul.f32 %v1496, %v35
    %v1545 = vmul.f32 %v1500, %v36
    %v1546 = vmul.f32 %v1504, %v37
    %v1547 = vmul.f32 %v1508, %v38
    %v1548 = vmul.f32 %v1512, %v39
    %v1549 = vmul.f32 %v1516, %v40
    %1582 = vrot.lane.b32.xlu0 %v1518, 30
    %v1583 = vpop.permute.xlu0 %1582
    %1584 = vrot.lane.b32.xlu0 %v1519, 30
    %v1585 = vpop.permute.xlu0 %1584
    %1586 = vrot.lane.b32.xlu0 %v1520, 30
    %v1587 = vpop.permute.xlu0 %1586
    %1588 = vrot.lane.b32.xlu0 %v1521, 30
    %v1589 = vpop.permute.xlu0 %1588
    %1590 = vrot.lane.b32.xlu0 %v1522, 30
    %v1591 = vpop.permute.xlu0 %1590
    %1592 = vrot.lane.b32.xlu0 %v1523, 30
    %v1593 = vpop.permute.xlu0 %1592
    %1594 = vrot.lane.b32.xlu0 %v1524, 30
    %v1595 = vpop.permute.xlu0 %1594
    %1596 = vrot.lane.b32.xlu0 %v1525, 30
    %v1597 = vpop.permute.xlu0 %1596
    %1598 = vrot.lane.b32.xlu0 %v1526, 30
    %v1599 = vpop.permute.xlu0 %1598
    %1600 = vrot.lane.b32.xlu0 %v1527, 30
    %v1601 = vpop.permute.xlu0 %1600
    %1602 = vrot.lane.b32.xlu0 %v1528, 30
    %v1603 = vpop.permute.xlu0 %1602
    %1604 = vrot.lane.b32.xlu0 %v1529, 30
    %v1605 = vpop.permute.xlu0 %1604
    %1606 = vrot.lane.b32.xlu0 %v1530, 30
    %v1607 = vpop.permute.xlu0 %1606
    %1608 = vrot.lane.b32.xlu0 %v1531, 30
    %v1609 = vpop.permute.xlu0 %1608
    %1610 = vrot.lane.b32.xlu0 %v1532, 30
    %v1611 = vpop.permute.xlu0 %1610
    %1612 = vrot.lane.b32.xlu0 %v1533, 30
    %v1613 = vpop.permute.xlu0 %1612
    %1614 = vrot.lane.b32.xlu0 %v1534, 30
    %v1615 = vpop.permute.xlu0 %1614
    %1616 = vrot.lane.b32.xlu0 %v1535, 30
    %v1617 = vpop.permute.xlu0 %1616
    %1618 = vrot.lane.b32.xlu0 %v1536, 30
    %v1619 = vpop.permute.xlu0 %1618
    %1620 = vrot.lane.b32.xlu0 %v1537, 30
    %v1621 = vpop.permute.xlu0 %1620
    %1622 = vrot.lane.b32.xlu0 %v1538, 30
    %v1623 = vpop.permute.xlu0 %1622
    %1624 = vrot.lane.b32.xlu0 %v1539, 30
    %v1625 = vpop.permute.xlu0 %1624
    %1626 = vrot.lane.b32.xlu0 %v1540, 30
    %v1627 = vpop.permute.xlu0 %1626
    %1628 = vrot.lane.b32.xlu0 %v1541, 30
    %v1629 = vpop.permute.xlu0 %1628
    %1630 = vrot.lane.b32.xlu0 %v1542, 30
    %v1631 = vpop.permute.xlu0 %1630
    %1632 = vrot.lane.b32.xlu0 %v1543, 30
    %v1633 = vpop.permute.xlu0 %1632
    %1634 = vrot.lane.b32.xlu0 %v1544, 30
    %v1635 = vpop.permute.xlu0 %1634
    %1636 = vrot.lane.b32.xlu0 %v1545, 30
    %v1637 = vpop.permute.xlu0 %1636
    %1638 = vrot.lane.b32.xlu0 %v1546, 30
    %v1639 = vpop.permute.xlu0 %1638
    %1640 = vrot.lane.b32.xlu0 %v1547, 30
    %v1641 = vpop.permute.xlu0 %1640
    %1642 = vrot.lane.b32.xlu0 %v1548, 30
    %v1643 = vpop.permute.xlu0 %1642
    %1644 = vrot.lane.b32.xlu0 %v1549, 30
    %v1645 = vpop.permute.xlu0 %1644
    %vm1678 = vcmask 310544
    %1679 = vst.msk [vmem:[#allocation2] sm:$0xff] %vm1678, %v1583
    %1680 = vst.msk [vmem:[#allocation2 + $0x8] sm:$0xff] %vm1678, %v1585
    %1681 = vst.msk [vmem:[#allocation2 + $0x10] sm:$0xff] %vm1678, %v1587
    %1682 = vst.msk [vmem:[#allocation2 + $0x18] sm:$0xff] %vm1678, %v1589
    %1683 = vst.msk [vmem:[#allocation2 + $0x20] sm:$0xff] %vm1678, %v1591
    %1684 = vst.msk [vmem:[#allocation2 + $0x28] sm:$0xff] %vm1678, %v1593
    %1685 = vst.msk [vmem:[#allocation2 + $0x30] sm:$0xff] %vm1678, %v1595
    %1686 = vst.msk [vmem:[#allocation2 + $0x38] sm:$0xff] %vm1678, %v1597
    %1687 = vst.msk [vmem:[#allocation2 + $0x40] sm:$0xff] %vm1678, %v1599
    %1688 = vst.msk [vmem:[#allocation2 + $0x48] sm:$0xff] %vm1678, %v1601
    %1689 = vst.msk [vmem:[#allocation2 + $0x50] sm:$0xff] %vm1678, %v1603
    %1690 = vst.msk [vmem:[#allocation2 + $0x58] sm:$0xff] %vm1678, %v1605
    %1691 = vst.msk [vmem:[#allocation2 + $0x60] sm:$0xff] %vm1678, %v1607
    %1692 = vst.msk [vmem:[#allocation2 + $0x68] sm:$0xff] %vm1678, %v1609
    %1693 = vst.msk [vmem:[#allocation2 + $0x70] sm:$0xff] %vm1678, %v1611
    %1694 = vst.msk [vmem:[#allocation2 + $0x78] sm:$0xff] %vm1678, %v1613
    %1695 = vst.msk [vmem:[#allocation2 + $0x80] sm:$0xff] %vm1678, %v1615
    %1696 = vst.msk [vmem:[#allocation2 + $0x88] sm:$0xff] %vm1678, %v1617
    %1697 = vst.msk [vmem:[#allocation2 + $0x90] sm:$0xff] %vm1678, %v1619
    %1698 = vst.msk [vmem:[#allocation2 + $0x98] sm:$0xff] %vm1678, %v1621
    %1699 = vst.msk [vmem:[#allocation2 + $0xa0] sm:$0xff] %vm1678, %v1623
    %1700 = vst.msk [vmem:[#allocation2 + $0xa8] sm:$0xff] %vm1678, %v1625
    %1701 = vst.msk [vmem:[#allocation2 + $0xb0] sm:$0xff] %vm1678, %v1627
    %1702 = vst.msk [vmem:[#allocation2 + $0xb8] sm:$0xff] %vm1678, %v1629
    %1703 = vst.msk [vmem:[#allocation2 + $0xc0] sm:$0xff] %vm1678, %v1631
    %1704 = vst.msk [vmem:[#allocation2 + $0xc8] sm:$0xff] %vm1678, %v1633
    %1705 = vst.msk [vmem:[#allocation2 + $0xd0] sm:$0xff] %vm1678, %v1635
    %1706 = vst.msk [vmem:[#allocation2 + $0xd8] sm:$0xff] %vm1678, %v1637
    %1707 = vst.msk [vmem:[#allocation2 + $0xe0] sm:$0xff] %vm1678, %v1639
    %1708 = vst.msk [vmem:[#allocation2 + $0xe8] sm:$0xff] %vm1678, %v1641
    %1709 = vst.msk [vmem:[#allocation2 + $0xf0] sm:$0xff] %vm1678, %v1643
    %1710 = vst.msk [vmem:[#allocation2 + $0xf8] sm:$0xff] %vm1678, %v1645
    %1711 = vset.pattern.permute.xlu0 5
    %1712 = vperm.xlu0 %1711, %v9
    %v1713 = vpop.permute.xlu0 %1712
    %1715 = vset.pattern.permute.xlu0 5
    %1716 = vperm.xlu0 %1715, %v10
    %v1717 = vpop.permute.xlu0 %1716
    %1719 = vset.pattern.permute.xlu0 5
    %1720 = vperm.xlu0 %1719, %v11
    %v1721 = vpop.permute.xlu0 %1720
    %1723 = vset.pattern.permute.xlu0 5
    %1724 = vperm.xlu0 %1723, %v12
    %v1725 = vpop.permute.xlu0 %1724
    %1727 = vset.pattern.permute.xlu0 5
    %1728 = vperm.xlu0 %1727, %v13
    %v1729 = vpop.permute.xlu0 %1728
    %1731 = vset.pattern.permute.xlu0 5
    %1732 = vperm.xlu0 %1731, %v14
    %v1733 = vpop.permute.xlu0 %1732
    %1735 = vset.pattern.permute.xlu0 5
    %1736 = vperm.xlu0 %1735, %v15
    %v1737 = vpop.permute.xlu0 %1736
    %1739 = vset.pattern.permute.xlu0 5
    %1740 = vperm.xlu0 %1739, %v16
    %v1741 = vpop.permute.xlu0 %1740
    %1743 = vset.pattern.permute.xlu0 5
    %1744 = vperm.xlu0 %1743, %v17
    %v1745 = vpop.permute.xlu0 %1744
    %1747 = vset.pattern.permute.xlu0 5
    %1748 = vperm.xlu0 %1747, %v18
    %v1749 = vpop.permute.xlu0 %1748
    %1751 = vset.pattern.permute.xlu0 5
    %1752 = vperm.xlu0 %1751, %v19
    %v1753 = vpop.permute.xlu0 %1752
    %1755 = vset.pattern.permute.xlu0 5
    %1756 = vperm.xlu0 %1755, %v20
    %v1757 = vpop.permute.xlu0 %1756
    %1759 = vset.pattern.permute.xlu0 5
    %1760 = vperm.xlu0 %1759, %v21
    %v1761 = vpop.permute.xlu0 %1760
    %1763 = vset.pattern.permute.xlu0 5
    %1764 = vperm.xlu0 %1763, %v22
    %v1765 = vpop.permute.xlu0 %1764
    %1767 = vset.pattern.permute.xlu0 5
    %1768 = vperm.xlu0 %1767, %v23
    %v1769 = vpop.permute.xlu0 %1768
    %1771 = vset.pattern.permute.xlu0 5
    %1772 = vperm.xlu0 %1771, %v24
    %v1773 = vpop.permute.xlu0 %1772
    %1775 = vset.pattern.permute.xlu0 5
    %1776 = vperm.xlu0 %1775, %v25
    %v1777 = vpop.permute.xlu0 %1776
    %1779 = vset.pattern.permute.xlu0 5
    %1780 = vperm.xlu0 %1779, %v26
    %v1781 = vpop.permute.xlu0 %1780
    %1783 = vset.pattern.permute.xlu0 5
    %1784 = vperm.xlu0 %1783, %v27
    %v1785 = vpop.permute.xlu0 %1784
    %1787 = vset.pattern.permute.xlu0 5
    %1788 = vperm.xlu0 %1787, %v28
    %v1789 = vpop.permute.xlu0 %1788
    %1791 = vset.pattern.permute.xlu0 5
    %1792 = vperm.xlu0 %1791, %v29
    %v1793 = vpop.permute.xlu0 %1792
    %1795 = vset.pattern.permute.xlu0 5
    %1796 = vperm.xlu0 %1795, %v30
    %v1797 = vpop.permute.xlu0 %1796
    %1799 = vset.pattern.permute.xlu0 5
    %1800 = vperm.xlu0 %1799, %v31
    %v1801 = vpop.permute.xlu0 %1800
    %1803 = vset.pattern.permute.xlu0 5
    %1804 = vperm.xlu0 %1803, %v32
    %v1805 = vpop.permute.xlu0 %1804
    %1807 = vset.pattern.permute.xlu0 5
    %1808 = vperm.xlu0 %1807, %v33
    %v1809 = vpop.permute.xlu0 %1808
    %1811 = vset.pattern.permute.xlu0 5
    %1812 = vperm.xlu0 %1811, %v34
    %v1813 = vpop.permute.xlu0 %1812
    %1815 = vset.pattern.permute.xlu0 5
    %1816 = vperm.xlu0 %1815, %v35
    %v1817 = vpop.permute.xlu0 %1816
    %1819 = vset.pattern.permute.xlu0 5
    %1820 = vperm.xlu0 %1819, %v36
    %v1821 = vpop.permute.xlu0 %1820
    %1823 = vset.pattern.permute.xlu0 5
    %1824 = vperm.xlu0 %1823, %v37
    %v1825 = vpop.permute.xlu0 %1824
    %1827 = vset.pattern.permute.xlu0 5
    %1828 = vperm.xlu0 %1827, %v38
    %v1829 = vpop.permute.xlu0 %1828
    %1831 = vset.pattern.permute.xlu0 5
    %1832 = vperm.xlu0 %1831, %v39
    %v1833 = vpop.permute.xlu0 %1832
    %1835 = vset.pattern.permute.xlu0 5
    %1836 = vperm.xlu0 %1835, %v40
    %v1837 = vpop.permute.xlu0 %1836
    %v1839 = vmul.f32 %v1713, %v9
    %v1840 = vmul.f32 %v1717, %v10
    %v1841 = vmul.f32 %v1721, %v11
    %v1842 = vmul.f32 %v1725, %v12
    %v1843 = vmul.f32 %v1729, %v13
    %v1844 = vmul.f32 %v1733, %v14
    %v1845 = vmul.f32 %v1737, %v15
    %v1846 = vmul.f32 %v1741, %v16
    %v1847 = vmul.f32 %v1745, %v17
    %v1848 = vmul.f32 %v1749, %v18
    %v1849 = vmul.f32 %v1753, %v19
    %v1850 = vmul.f32 %v1757, %v20
    %v1851 = vmul.f32 %v1761, %v21
    %v1852 = vmul.f32 %v1765, %v22
    %v1853 = vmul.f32 %v1769, %v23
    %v1854 = vmul.f32 %v1773, %v24
    %v1855 = vmul.f32 %v1777, %v25
    %v1856 = vmul.f32 %v1781, %v26
    %v1857 = vmul.f32 %v1785, %v27
    %v1858 = vmul.f32 %v1789, %v28
    %v1859 = vmul.f32 %v1793, %v29
    %v1860 = vmul.f32 %v1797, %v30
    %v1861 = vmul.f32 %v1801, %v31
    %v1862 = vmul.f32 %v1805, %v32
    %v1863 = vmul.f32 %v1809, %v33
    %v1864 = vmul.f32 %v1813, %v34
    %v1865 = vmul.f32 %v1817, %v35
    %v1866 = vmul.f32 %v1821, %v36
    %v1867 = vmul.f32 %v1825, %v37
    %v1868 = vmul.f32 %v1829, %v38
    %v1869 = vmul.f32 %v1833, %v39
    %v1870 = vmul.f32 %v1837, %v40
    %1903 = vrot.lane.b32.xlu0 %v1839, 33
    %v1904 = vpop.permute.xlu0 %1903
    %1905 = vrot.lane.b32.xlu0 %v1840, 33
    %v1906 = vpop.permute.xlu0 %1905
    %1907 = vrot.lane.b32.xlu0 %v1841, 33
    %v1908 = vpop.permute.xlu0 %1907
    %1909 = vrot.lane.b32.xlu0 %v1842, 33
    %v1910 = vpop.permute.xlu0 %1909
    %1911 = vrot.lane.b32.xlu0 %v1843, 33
    %v1912 = vpop.permute.xlu0 %1911
    %1913 = vrot.lane.b32.xlu0 %v1844, 33
    %v1914 = vpop.permute.xlu0 %1913
    %1915 = vrot.lane.b32.xlu0 %v1845, 33
    %v1916 = vpop.permute.xlu0 %1915
    %1917 = vrot.lane.b32.xlu0 %v1846, 33
    %v1918 = vpop.permute.xlu0 %1917
    %1919 = vrot.lane.b32.xlu0 %v1847, 33
    %v1920 = vpop.permute.xlu0 %1919
    %1921 = vrot.lane.b32.xlu0 %v1848, 33
    %v1922 = vpop.permute.xlu0 %1921
    %1923 = vrot.lane.b32.xlu0 %v1849, 33
    %v1924 = vpop.permute.xlu0 %1923
    %1925 = vrot.lane.b32.xlu0 %v1850, 33
    %v1926 = vpop.permute.xlu0 %1925
    %1927 = vrot.lane.b32.xlu0 %v1851, 33
    %v1928 = vpop.permute.xlu0 %1927
    %1929 = vrot.lane.b32.xlu0 %v1852, 33
    %v1930 = vpop.permute.xlu0 %1929
    %1931 = vrot.lane.b32.xlu0 %v1853, 33
    %v1932 = vpop.permute.xlu0 %1931
    %1933 = vrot.lane.b32.xlu0 %v1854, 33
    %v1934 = vpop.permute.xlu0 %1933
    %1935 = vrot.lane.b32.xlu0 %v1855, 33
    %v1936 = vpop.permute.xlu0 %1935
    %1937 = vrot.lane.b32.xlu0 %v1856, 33
    %v1938 = vpop.permute.xlu0 %1937
    %1939 = vrot.lane.b32.xlu0 %v1857, 33
    %v1940 = vpop.permute.xlu0 %1939
    %1941 = vrot.lane.b32.xlu0 %v1858, 33
    %v1942 = vpop.permute.xlu0 %1941
    %1943 = vrot.lane.b32.xlu0 %v1859, 33
    %v1944 = vpop.permute.xlu0 %1943
    %1945 = vrot.lane.b32.xlu0 %v1860, 33
    %v1946 = vpop.permute.xlu0 %1945
    %1947 = vrot.lane.b32.xlu0 %v1861, 33
    %v1948 = vpop.permute.xlu0 %1947
    %1949 = vrot.lane.b32.xlu0 %v1862, 33
    %v1950 = vpop.permute.xlu0 %1949
    %1951 = vrot.lane.b32.xlu0 %v1863, 33
    %v1952 = vpop.permute.xlu0 %1951
    %1953 = vrot.lane.b32.xlu0 %v1864, 33
    %v1954 = vpop.permute.xlu0 %1953
    %1955 = vrot.lane.b32.xlu0 %v1865, 33
    %v1956 = vpop.permute.xlu0 %1955
    %1957 = vrot.lane.b32.xlu0 %v1866, 33
    %v1958 = vpop.permute.xlu0 %1957
    %1959 = vrot.lane.b32.xlu0 %v1867, 33
    %v1960 = vpop.permute.xlu0 %1959
    %1961 = vrot.lane.b32.xlu0 %v1868, 33
    %v1962 = vpop.permute.xlu0 %1961
    %1963 = vrot.lane.b32.xlu0 %v1869, 33
    %v1964 = vpop.permute.xlu0 %1963
    %1965 = vrot.lane.b32.xlu0 %v1870, 33
    %v1966 = vpop.permute.xlu0 %1965
    %vm1999 = vcmask 335152
    %2000 = vst.msk [vmem:[#allocation2] sm:$0xff] %vm1999, %v1904
    %2001 = vst.msk [vmem:[#allocation2 + $0x8] sm:$0xff] %vm1999, %v1906
    %2002 = vst.msk [vmem:[#allocation2 + $0x10] sm:$0xff] %vm1999, %v1908
    %2003 = vst.msk [vmem:[#allocation2 + $0x18] sm:$0xff] %vm1999, %v1910
    %2004 = vst.msk [vmem:[#allocation2 + $0x20] sm:$0xff] %vm1999, %v1912
    %2005 = vst.msk [vmem:[#allocation2 + $0x28] sm:$0xff] %vm1999, %v1914
    %2006 = vst.msk [vmem:[#allocation2 + $0x30] sm:$0xff] %vm1999, %v1916
    %2007 = vst.msk [vmem:[#allocation2 + $0x38] sm:$0xff] %vm1999, %v1918
    %2008 = vst.msk [vmem:[#allocation2 + $0x40] sm:$0xff] %vm1999, %v1920
    %2009 = vst.msk [vmem:[#allocation2 + $0x48] sm:$0xff] %vm1999, %v1922
    %2010 = vst.msk [vmem:[#allocation2 + $0x50] sm:$0xff] %vm1999, %v1924
    %2011 = vst.msk [vmem:[#allocation2 + $0x58] sm:$0xff] %vm1999, %v1926
    %2012 = vst.msk [vmem:[#allocation2 + $0x60] sm:$0xff] %vm1999, %v1928
    %2013 = vst.msk [vmem:[#allocation2 + $0x68] sm:$0xff] %vm1999, %v1930
    %2014 = vst.msk [vmem:[#allocation2 + $0x70] sm:$0xff] %vm1999, %v1932
    %2015 = vst.msk [vmem:[#allocation2 + $0x78] sm:$0xff] %vm1999, %v1934
    %2016 = vst.msk [vmem:[#allocation2 + $0x80] sm:$0xff] %vm1999, %v1936
    %2017 = vst.msk [vmem:[#allocation2 + $0x88] sm:$0xff] %vm1999, %v1938
    %2018 = vst.msk [vmem:[#allocation2 + $0x90] sm:$0xff] %vm1999, %v1940
    %2019 = vst.msk [vmem:[#allocation2 + $0x98] sm:$0xff] %vm1999, %v1942
    %2020 = vst.msk [vmem:[#allocation2 + $0xa0] sm:$0xff] %vm1999, %v1944
    %2021 = vst.msk [vmem:[#allocation2 + $0xa8] sm:$0xff] %vm1999, %v1946
    %2022 = vst.msk [vmem:[#allocation2 + $0xb0] sm:$0xff] %vm1999, %v1948
    %2023 = vst.msk [vmem:[#allocation2 + $0xb8] sm:$0xff] %vm1999, %v1950
    %2024 = vst.msk [vmem:[#allocation2 + $0xc0] sm:$0xff] %vm1999, %v1952
    %2025 = vst.msk [vmem:[#allocation2 + $0xc8] sm:$0xff] %vm1999, %v1954
    %2026 = vst.msk [vmem:[#allocation2 + $0xd0] sm:$0xff] %vm1999, %v1956
    %2027 = vst.msk [vmem:[#allocation2 + $0xd8] sm:$0xff] %vm1999, %v1958
    %2028 = vst.msk [vmem:[#allocation2 + $0xe0] sm:$0xff] %vm1999, %v1960
    %2029 = vst.msk [vmem:[#allocation2 + $0xe8] sm:$0xff] %vm1999, %v1962
    %2030 = vst.msk [vmem:[#allocation2 + $0xf0] sm:$0xff] %vm1999, %v1964
    %2031 = vst.msk [vmem:[#allocation2 + $0xf8] sm:$0xff] %vm1999, %v1966
    %2032 = vset.pattern.permute.xlu0 6
    %2033 = vperm.xlu0 %2032, %v9
    %v2034 = vpop.permute.xlu0 %2033
    %2036 = vset.pattern.permute.xlu0 6
    %2037 = vperm.xlu0 %2036, %v10
    %v2038 = vpop.permute.xlu0 %2037
    %2040 = vset.pattern.permute.xlu0 6
    %2041 = vperm.xlu0 %2040, %v11
    %v2042 = vpop.permute.xlu0 %2041
    %2044 = vset.pattern.permute.xlu0 6
    %2045 = vperm.xlu0 %2044, %v12
    %v2046 = vpop.permute.xlu0 %2045
    %2048 = vset.pattern.permute.xlu0 6
    %2049 = vperm.xlu0 %2048, %v13
    %v2050 = vpop.permute.xlu0 %2049
    %2052 = vset.pattern.permute.xlu0 6
    %2053 = vperm.xlu0 %2052, %v14
    %v2054 = vpop.permute.xlu0 %2053
    %2056 = vset.pattern.permute.xlu0 6
    %2057 = vperm.xlu0 %2056, %v15
    %v2058 = vpop.permute.xlu0 %2057
    %2060 = vset.pattern.permute.xlu0 6
    %2061 = vperm.xlu0 %2060, %v16
    %v2062 = vpop.permute.xlu0 %2061
    %2064 = vset.pattern.permute.xlu0 6
    %2065 = vperm.xlu0 %2064, %v17
    %v2066 = vpop.permute.xlu0 %2065
    %2068 = vset.pattern.permute.xlu0 6
    %2069 = vperm.xlu0 %2068, %v18
    %v2070 = vpop.permute.xlu0 %2069
    %2072 = vset.pattern.permute.xlu0 6
    %2073 = vperm.xlu0 %2072, %v19
    %v2074 = vpop.permute.xlu0 %2073
    %2076 = vset.pattern.permute.xlu0 6
    %2077 = vperm.xlu0 %2076, %v20
    %v2078 = vpop.permute.xlu0 %2077
    %2080 = vset.pattern.permute.xlu0 6
    %2081 = vperm.xlu0 %2080, %v21
    %v2082 = vpop.permute.xlu0 %2081
    %2084 = vset.pattern.permute.xlu0 6
    %2085 = vperm.xlu0 %2084, %v22
    %v2086 = vpop.permute.xlu0 %2085
    %2088 = vset.pattern.permute.xlu0 6
    %2089 = vperm.xlu0 %2088, %v23
    %v2090 = vpop.permute.xlu0 %2089
    %2092 = vset.pattern.permute.xlu0 6
    %2093 = vperm.xlu0 %2092, %v24
    %v2094 = vpop.permute.xlu0 %2093
    %2096 = vset.pattern.permute.xlu0 6
    %2097 = vperm.xlu0 %2096, %v25
    %v2098 = vpop.permute.xlu0 %2097
    %2100 = vset.pattern.permute.xlu0 6
    %2101 = vperm.xlu0 %2100, %v26
    %v2102 = vpop.permute.xlu0 %2101
    %2104 = vset.pattern.permute.xlu0 6
    %2105 = vperm.xlu0 %2104, %v27
    %v2106 = vpop.permute.xlu0 %2105
    %2108 = vset.pattern.permute.xlu0 6
    %2109 = vperm.xlu0 %2108, %v28
    %v2110 = vpop.permute.xlu0 %2109
    %2112 = vset.pattern.permute.xlu0 6
    %2113 = vperm.xlu0 %2112, %v29
    %v2114 = vpop.permute.xlu0 %2113
    %2116 = vset.pattern.permute.xlu0 6
    %2117 = vperm.xlu0 %2116, %v30
    %v2118 = vpop.permute.xlu0 %2117
    %2120 = vset.pattern.permute.xlu0 6
    %2121 = vperm.xlu0 %2120, %v31
    %v2122 = vpop.permute.xlu0 %2121
    %2124 = vset.pattern.permute.xlu0 6
    %2125 = vperm.xlu0 %2124, %v32
    %v2126 = vpop.permute.xlu0 %2125
    %2128 = vset.pattern.permute.xlu0 6
    %2129 = vperm.xlu0 %2128, %v33
    %v2130 = vpop.permute.xlu0 %2129
    %2132 = vset.pattern.permute.xlu0 6
    %2133 = vperm.xlu0 %2132, %v34
    %v2134 = vpop.permute.xlu0 %2133
    %2136 = vset.pattern.permute.xlu0 6
    %2137 = vperm.xlu0 %2136, %v35
    %v2138 = vpop.permute.xlu0 %2137
    %2140 = vset.pattern.permute.xlu0 6
    %2141 = vperm.xlu0 %2140, %v36
    %v2142 = vpop.permute.xlu0 %2141
    %2144 = vset.pattern.permute.xlu0 6
    %2145 = vperm.xlu0 %2144, %v37
    %v2146 = vpop.permute.xlu0 %2145
    %2148 = vset.pattern.permute.xlu0 6
    %2149 = vperm.xlu0 %2148, %v38
    %v2150 = vpop.permute.xlu0 %2149
    %2152 = vset.pattern.permute.xlu0 6
    %2153 = vperm.xlu0 %2152, %v39
    %v2154 = vpop.permute.xlu0 %2153
    %2156 = vset.pattern.permute.xlu0 6
    %2157 = vperm.xlu0 %2156, %v40
    %v2158 = vpop.permute.xlu0 %2157
    %v2160 = vmul.f32 %v2034, %v9
    %v2161 = vmul.f32 %v2038, %v10
    %v2162 = vmul.f32 %v2042, %v11
    %v2163 = vmul.f32 %v2046, %v12
    %v2164 = vmul.f32 %v2050, %v13
    %v2165 = vmul.f32 %v2054, %v14
    %v2166 = vmul.f32 %v2058, %v15
    %v2167 = vmul.f32 %v2062, %v16
    %v2168 = vmul.f32 %v2066, %v17
    %v2169 = vmul.f32 %v2070, %v18
    %v2170 = vmul.f32 %v2074, %v19
    %v2171 = vmul.f32 %v2078, %v20
    %v2172 = vmul.f32 %v2082, %v21
    %v2173 = vmul.f32 %v2086, %v22
    %v2174 = vmul.f32 %v2090, %v23
    %v2175 = vmul.f32 %v2094, %v24
    %v2176 = vmul.f32 %v2098, %v25
    %v2177 = vmul.f32 %v2102, %v26
    %v2178 = vmul.f32 %v2106, %v27
    %v2179 = vmul.f32 %v2110, %v28
    %v2180 = vmul.f32 %v2114, %v29
    %v2181 = vmul.f32 %v2118, %v30
    %v2182 = vmul.f32 %v2122, %v31
    %v2183 = vmul.f32 %v2126, %v32
    %v2184 = vmul.f32 %v2130, %v33
    %v2185 = vmul.f32 %v2134, %v34
    %v2186 = vmul.f32 %v2138, %v35
    %v2187 = vmul.f32 %v2142, %v36
    %v2188 = vmul.f32 %v2146, %v37
    %v2189 = vmul.f32 %v2150, %v38
    %v2190 = vmul.f32 %v2154, %v39
    %v2191 = vmul.f32 %v2158, %v40
    %2224 = vrot.lane.b32.xlu0 %v2160, 35
    %v2225 = vpop.permute.xlu0 %2224
    %2226 = vrot.lane.b32.xlu0 %v2161, 35
    %v2227 = vpop.permute.xlu0 %2226
    %2228 = vrot.lane.b32.xlu0 %v2162, 35
    %v2229 = vpop.permute.xlu0 %2228
    %2230 = vrot.lane.b32.xlu0 %v2163, 35
    %v2231 = vpop.permute.xlu0 %2230
    %2232 = vrot.lane.b32.xlu0 %v2164, 35
    %v2233 = vpop.permute.xlu0 %2232
    %2234 = vrot.lane.b32.xlu0 %v2165, 35
    %v2235 = vpop.permute.xlu0 %2234
    %2236 = vrot.lane.b32.xlu0 %v2166, 35
    %v2237 = vpop.permute.xlu0 %2236
    %2238 = vrot.lane.b32.xlu0 %v2167, 35
    %v2239 = vpop.permute.xlu0 %2238
    %2240 = vrot.lane.b32.xlu0 %v2168, 35
    %v2241 = vpop.permute.xlu0 %2240
    %2242 = vrot.lane.b32.xlu0 %v2169, 35
    %v2243 = vpop.permute.xlu0 %2242
    %2244 = vrot.lane.b32.xlu0 %v2170, 35
    %v2245 = vpop.permute.xlu0 %2244
    %2246 = vrot.lane.b32.xlu0 %v2171, 35
    %v2247 = vpop.permute.xlu0 %2246
    %2248 = vrot.lane.b32.xlu0 %v2172, 35
    %v2249 = vpop.permute.xlu0 %2248
    %2250 = vrot.lane.b32.xlu0 %v2173, 35
    %v2251 = vpop.permute.xlu0 %2250
    %2252 = vrot.lane.b32.xlu0 %v2174, 35
    %v2253 = vpop.permute.xlu0 %2252
    %2254 = vrot.lane.b32.xlu0 %v2175, 35
    %v2255 = vpop.permute.xlu0 %2254
    %2256 = vrot.lane.b32.xlu0 %v2176, 35
    %v2257 = vpop.permute.xlu0 %2256
    %2258 = vrot.lane.b32.xlu0 %v2177, 35
    %v2259 = vpop.permute.xlu0 %2258
    %2260 = vrot.lane.b32.xlu0 %v2178, 35
    %v2261 = vpop.permute.xlu0 %2260
    %2262 = vrot.lane.b32.xlu0 %v2179, 35
    %v2263 = vpop.permute.xlu0 %2262
    %2264 = vrot.lane.b32.xlu0 %v2180, 35
    %v2265 = vpop.permute.xlu0 %2264
    %2266 = vrot.lane.b32.xlu0 %v2181, 35
    %v2267 = vpop.permute.xlu0 %2266
    %2268 = vrot.lane.b32.xlu0 %v2182, 35
    %v2269 = vpop.permute.xlu0 %2268
    %2270 = vrot.lane.b32.xlu0 %v2183, 35
    %v2271 = vpop.permute.xlu0 %2270
    %2272 = vrot.lane.b32.xlu0 %v2184, 35
    %v2273 = vpop.permute.xlu0 %2272
    %2274 = vrot.lane.b32.xlu0 %v2185, 35
    %v2275 = vpop.permute.xlu0 %2274
    %2276 = vrot.lane.b32.xlu0 %v2186, 35
    %v2277 = vpop.permute.xlu0 %2276
    %2278 = vrot.lane.b32.xlu0 %v2187, 35
    %v2279 = vpop.permute.xlu0 %2278
    %2280 = vrot.lane.b32.xlu0 %v2188, 35
    %v2281 = vpop.permute.xlu0 %2280
    %2282 = vrot.lane.b32.xlu0 %v2189, 35
    %v2283 = vpop.permute.xlu0 %2282
    %2284 = vrot.lane.b32.xlu0 %v2190, 35
    %v2285 = vpop.permute.xlu0 %2284
    %2286 = vrot.lane.b32.xlu0 %v2191, 35
    %v2287 = vpop.permute.xlu0 %2286
    %vm2320 = vcmask 351560
    %2321 = vst.msk [vmem:[#allocation2] sm:$0xff] %vm2320, %v2225
    %2322 = vst.msk [vmem:[#allocation2 + $0x8] sm:$0xff] %vm2320, %v2227
    %2323 = vst.msk [vmem:[#allocation2 + $0x10] sm:$0xff] %vm2320, %v2229
    %2324 = vst.msk [vmem:[#allocation2 + $0x18] sm:$0xff] %vm2320, %v2231
    %2325 = vst.msk [vmem:[#allocation2 + $0x20] sm:$0xff] %vm2320, %v2233
    %2326 = vst.msk [vmem:[#allocation2 + $0x28] sm:$0xff] %vm2320, %v2235
    %2327 = vst.msk [vmem:[#allocation2 + $0x30] sm:$0xff] %vm2320, %v2237
    %2328 = vst.msk [vmem:[#allocation2 + $0x38] sm:$0xff] %vm2320, %v2239
    %2329 = vst.msk [vmem:[#allocation2 + $0x40] sm:$0xff] %vm2320, %v2241
    %2330 = vst.msk [vmem:[#allocation2 + $0x48] sm:$0xff] %vm2320, %v2243
    %2331 = vst.msk [vmem:[#allocation2 + $0x50] sm:$0xff] %vm2320, %v2245
    %2332 = vst.msk [vmem:[#allocation2 + $0x58] sm:$0xff] %vm2320, %v2247
    %2333 = vst.msk [vmem:[#allocation2 + $0x60] sm:$0xff] %vm2320, %v2249
    %2334 = vst.msk [vmem:[#allocation2 + $0x68] sm:$0xff] %vm2320, %v2251
    %2335 = vst.msk [vmem:[#allocation2 + $0x70] sm:$0xff] %vm2320, %v2253
    %2336 = vst.msk [vmem:[#allocation2 + $0x78] sm:$0xff] %vm2320, %v2255
    %2337 = vst.msk [vmem:[#allocation2 + $0x80] sm:$0xff] %vm2320, %v2257
    %2338 = vst.msk [vmem:[#allocation2 + $0x88] sm:$0xff] %vm2320, %v2259
    %2339 = vst.msk [vmem:[#allocation2 + $0x90] sm:$0xff] %vm2320, %v2261
    %2340 = vst.msk [vmem:[#allocation2 + $0x98] sm:$0xff] %vm2320, %v2263
    %2341 = vst.msk [vmem:[#allocation2 + $0xa0] sm:$0xff] %vm2320, %v2265
    %2342 = vst.msk [vmem:[#allocation2 + $0xa8] sm:$0xff] %vm2320, %v2267
    %2343 = vst.msk [vmem:[#allocation2 + $0xb0] sm:$0xff] %vm2320, %v2269
    %2344 = vst.msk [vmem:[#allocation2 + $0xb8] sm:$0xff] %vm2320, %v2271
    %2345 = vst.msk [vmem:[#allocation2 + $0xc0] sm:$0xff] %vm2320, %v2273
    %2346 = vst.msk [vmem:[#allocation2 + $0xc8] sm:$0xff] %vm2320, %v2275
    %2347 = vst.msk [vmem:[#allocation2 + $0xd0] sm:$0xff] %vm2320, %v2277
    %2348 = vst.msk [vmem:[#allocation2 + $0xd8] sm:$0xff] %vm2320, %v2279
    %2349 = vst.msk [vmem:[#allocation2 + $0xe0] sm:$0xff] %vm2320, %v2281
    %2350 = vst.msk [vmem:[#allocation2 + $0xe8] sm:$0xff] %vm2320, %v2283
    %2351 = vst.msk [vmem:[#allocation2 + $0xf0] sm:$0xff] %vm2320, %v2285
    %2352 = vst.msk [vmem:[#allocation2 + $0xf8] sm:$0xff] %vm2320, %v2287
    %v2353 = vmul.f32 %v9, %v9
    %v2354 = vmul.f32 %v10, %v10
    %v2355 = vmul.f32 %v11, %v11
    %v2356 = vmul.f32 %v12, %v12
    %v2357 = vmul.f32 %v13, %v13
    %v2358 = vmul.f32 %v14, %v14
    %v2359 = vmul.f32 %v15, %v15
    %v2360 = vmul.f32 %v16, %v16
    %v2361 = vmul.f32 %v17, %v17
    %v2362 = vmul.f32 %v18, %v18
    %v2363 = vmul.f32 %v19, %v19
    %v2364 = vmul.f32 %v20, %v20
    %v2365 = vmul.f32 %v21, %v21
    %v2366 = vmul.f32 %v22, %v22
    %v2367 = vmul.f32 %v23, %v23
    %v2368 = vmul.f32 %v24, %v24
    %v2369 = vmul.f32 %v25, %v25
    %v2370 = vmul.f32 %v26, %v26
    %v2371 = vmul.f32 %v27, %v27
    %v2372 = vmul.f32 %v28, %v28
    %v2373 = vmul.f32 %v29, %v29
    %v2374 = vmul.f32 %v30, %v30
    %v2375 = vmul.f32 %v31, %v31
    %v2376 = vmul.f32 %v32, %v32
    %v2377 = vmul.f32 %v33, %v33
    %v2378 = vmul.f32 %v34, %v34
    %v2379 = vmul.f32 %v35, %v35
    %v2380 = vmul.f32 %v36, %v36
    %v2381 = vmul.f32 %v37, %v37
    %v2382 = vmul.f32 %v38, %v38
    %v2383 = vmul.f32 %v39, %v39
    %v2384 = vmul.f32 %v40, %v40
    %2417 = vrot.lane.b32.xlu0 %v2353, 36
    %v2418 = vpop.permute.xlu0 %2417
    %2419 = vrot.lane.b32.xlu0 %v2354, 36
    %v2420 = vpop.permute.xlu0 %2419
    %2421 = vrot.lane.b32.xlu0 %v2355, 36
    %v2422 = vpop.permute.xlu0 %2421
    %2423 = vrot.lane.b32.xlu0 %v2356, 36
    %v2424 = vpop.permute.xlu0 %2423
    %2425 = vrot.lane.b32.xlu0 %v2357, 36
    %v2426 = vpop.permute.xlu0 %2425
    %2427 = vrot.lane.b32.xlu0 %v2358, 36
    %v2428 = vpop.permute.xlu0 %2427
    %2429 = vrot.lane.b32.xlu0 %v2359, 36
    %v2430 = vpop.permute.xlu0 %2429
    %2431 = vrot.lane.b32.xlu0 %v2360, 36
    %v2432 = vpop.permute.xlu0 %2431
    %2433 = vrot.lane.b32.xlu0 %v2361, 36
    %v2434 = vpop.permute.xlu0 %2433
    %2435 = vrot.lane.b32.xlu0 %v2362, 36
    %v2436 = vpop.permute.xlu0 %2435
    %2437 = vrot.lane.b32.xlu0 %v2363, 36
    %v2438 = vpop.permute.xlu0 %2437
    %2439 = vrot.lane.b32.xlu0 %v2364, 36
    %v2440 = vpop.permute.xlu0 %2439
    %2441 = vrot.lane.b32.xlu0 %v2365, 36
    %v2442 = vpop.permute.xlu0 %2441
    %2443 = vrot.lane.b32.xlu0 %v2366, 36
    %v2444 = vpop.permute.xlu0 %2443
    %2445 = vrot.lane.b32.xlu0 %v2367, 36
    %v2446 = vpop.permute.xlu0 %2445
    %2447 = vrot.lane.b32.xlu0 %v2368, 36
    %v2448 = vpop.permute.xlu0 %2447
    %2449 = vrot.lane.b32.xlu0 %v2369, 36
    %v2450 = vpop.permute.xlu0 %2449
    %2451 = vrot.lane.b32.xlu0 %v2370, 36
    %v2452 = vpop.permute.xlu0 %2451
    %2453 = vrot.lane.b32.xlu0 %v2371, 36
    %v2454 = vpop.permute.xlu0 %2453
    %2455 = vrot.lane.b32.xlu0 %v2372, 36
    %v2456 = vpop.permute.xlu0 %2455
    %2457 = vrot.lane.b32.xlu0 %v2373, 36
    %v2458 = vpop.permute.xlu0 %2457
    %2459 = vrot.lane.b32.xlu0 %v2374, 36
    %v2460 = vpop.permute.xlu0 %2459
    %2461 = vrot.lane.b32.xlu0 %v2375, 36
    %v2462 = vpop.permute.xlu0 %2461
    %2463 = vrot.lane.b32.xlu0 %v2376, 36
    %v2464 = vpop.permute.xlu0 %2463
    %2465 = vrot.lane.b32.xlu0 %v2377, 36
    %v2466 = vpop.permute.xlu0 %2465
    %2467 = vrot.lane.b32.xlu0 %v2378, 36
    %v2468 = vpop.permute.xlu0 %2467
    %2469 = vrot.lane.b32.xlu0 %v2379, 36
    %v2470 = vpop.permute.xlu0 %2469
    %2471 = vrot.lane.b32.xlu0 %v2380, 36
    %v2472 = vpop.permute.xlu0 %2471
    %2473 = vrot.lane.b32.xlu0 %v2381, 36
    %v2474 = vpop.permute.xlu0 %2473
    %2475 = vrot.lane.b32.xlu0 %v2382, 36
    %v2476 = vpop.permute.xlu0 %2475
    %2477 = vrot.lane.b32.xlu0 %v2383, 36
    %v2478 = vpop.permute.xlu0 %2477
    %2479 = vrot.lane.b32.xlu0 %v2384, 36
    %v2480 = vpop.permute.xlu0 %2479
    %vm2513 = vcmask 359768
    %2514 = vst.msk [vmem:[#allocation2] sm:$0xff] %vm2513, %v2418
    %2515 = vst.msk [vmem:[#allocation2 + $0x8] sm:$0xff] %vm2513, %v2420
    %2516 = vst.msk [vmem:[#allocation2 + $0x10] sm:$0xff] %vm2513, %v2422
    %2517 = vst.msk [vmem:[#allocation2 + $0x18] sm:$0xff] %vm2513, %v2424
    %2518 = vst.msk [vmem:[#allocation2 + $0x20] sm:$0xff] %vm2513, %v2426
    %2519 = vst.msk [vmem:[#allocation2 + $0x28] sm:$0xff] %vm2513, %v2428
    %2520 = vst.msk [vmem:[#allocation2 + $0x30] sm:$0xff] %vm2513, %v2430
    %2521 = vst.msk [vmem:[#allocation2 + $0x38] sm:$0xff] %vm2513, %v2432
    %2522 = vst.msk [vmem:[#allocation2 + $0x40] sm:$0xff] %vm2513, %v2434
    %2523 = vst.msk [vmem:[#allocation2 + $0x48] sm:$0xff] %vm2513, %v2436
    %2524 = vst.msk [vmem:[#allocation2 + $0x50] sm:$0xff] %vm2513, %v2438
    %2525 = vst.msk [vmem:[#allocation2 + $0x58] sm:$0xff] %vm2513, %v2440
    %2526 = vst.msk [vmem:[#allocation2 + $0x60] sm:$0xff] %vm2513, %v2442
    %2527 = vst.msk [vmem:[#allocation2 + $0x68] sm:$0xff] %vm2513, %v2444
    %2528 = vst.msk [vmem:[#allocation2 + $0x70] sm:$0xff] %vm2513, %v2446
    %2529 = vst.msk [vmem:[#allocation2 + $0x78] sm:$0xff] %vm2513, %v2448
    %2530 = vst.msk [vmem:[#allocation2 + $0x80] sm:$0xff] %vm2513, %v2450
    %2531 = vst.msk [vmem:[#allocation2 + $0x88] sm:$0xff] %vm2513, %v2452
    %2532 = vst.msk [vmem:[#allocation2 + $0x90] sm:$0xff] %vm2513, %v2454
    %2533 = vst.msk [vmem:[#allocation2 + $0x98] sm:$0xff] %vm2513, %v2456
    %2534 = vst.msk [vmem:[#allocation2 + $0xa0] sm:$0xff] %vm2513, %v2458
    %2535 = vst.msk [vmem:[#allocation2 + $0xa8] sm:$0xff] %vm2513, %v2460
    %2536 = vst.msk [vmem:[#allocation2 + $0xb0] sm:$0xff] %vm2513, %v2462
    %2537 = vst.msk [vmem:[#allocation2 + $0xb8] sm:$0xff] %vm2513, %v2464
    %2538 = vst.msk [vmem:[#allocation2 + $0xc0] sm:$0xff] %vm2513, %v2466
    %2539 = vst.msk [vmem:[#allocation2 + $0xc8] sm:$0xff] %vm2513, %v2468
    %2540 = vst.msk [vmem:[#allocation2 + $0xd0] sm:$0xff] %vm2513, %v2470
    %2541 = vst.msk [vmem:[#allocation2 + $0xd8] sm:$0xff] %vm2513, %v2472
    %2542 = vst.msk [vmem:[#allocation2 + $0xe0] sm:$0xff] %vm2513, %v2474
    %2543 = vst.msk [vmem:[#allocation2 + $0xe8] sm:$0xff] %vm2513, %v2476
    %2544 = vst.msk [vmem:[#allocation2 + $0xf0] sm:$0xff] %vm2513, %v2478
    %2545 = vst.msk [vmem:[#allocation2 + $0xf8] sm:$0xff] %vm2513, %v2480
    %vm2546 = vcmask 1047904
    %2547 = vst.msk [vmem:[#allocation2] sm:$0xff] %vm2546, 0.0
    %2548 = vst.msk [vmem:[#allocation2 + $0x8] sm:$0xff] %vm2546, 0.0
    %2549 = vst.msk [vmem:[#allocation2 + $0x10] sm:$0xff] %vm2546, 0.0
    %2550 = vst.msk [vmem:[#allocation2 + $0x18] sm:$0xff] %vm2546, 0.0
    %2551 = vst.msk [vmem:[#allocation2 + $0x20] sm:$0xff] %vm2546, 0.0
    %2552 = vst.msk [vmem:[#allocation2 + $0x28] sm:$0xff] %vm2546, 0.0
    %2553 = vst.msk [vmem:[#allocation2 + $0x30] sm:$0xff] %vm2546, 0.0
    %2554 = vst.msk [vmem:[#allocation2 + $0x38] sm:$0xff] %vm2546, 0.0
    %2555 = vst.msk [vmem:[#allocation2 + $0x40] sm:$0xff] %vm2546, 0.0
    %2556 = vst.msk [vmem:[#allocation2 + $0x48] sm:$0xff] %vm2546, 0.0
    %2557 = vst.msk [vmem:[#allocation2 + $0x50] sm:$0xff] %vm2546, 0.0
    %2558 = vst.msk [vmem:[#allocation2 + $0x58] sm:$0xff] %vm2546, 0.0
    %2559 = vst.msk [vmem:[#allocation2 + $0x60] sm:$0xff] %vm2546, 0.0
    %2560 = vst.msk [vmem:[#allocation2 + $0x68] sm:$0xff] %vm2546, 0.0
    %2561 = vst.msk [vmem:[#allocation2 + $0x70] sm:$0xff] %vm2546, 0.0
    %2562 = vst.msk [vmem:[#allocation2 + $0x78] sm:$0xff] %vm2546, 0.0
    %2563 = vst.msk [vmem:[#allocation2 + $0x80] sm:$0xff] %vm2546, 0.0
    %2564 = vst.msk [vmem:[#allocation2 + $0x88] sm:$0xff] %vm2546, 0.0
    %2565 = vst.msk [vmem:[#allocation2 + $0x90] sm:$0xff] %vm2546, 0.0
    %2566 = vst.msk [vmem:[#allocation2 + $0x98] sm:$0xff] %vm2546, 0.0
    %2567 = vst.msk [vmem:[#allocation2 + $0xa0] sm:$0xff] %vm2546, 0.0
    %2568 = vst.msk [vmem:[#allocation2 + $0xa8] sm:$0xff] %vm2546, 0.0
    %2569 = vst.msk [vmem:[#allocation2 + $0xb0] sm:$0xff] %vm2546, 0.0
    %2570 = vst.msk [vmem:[#allocation2 + $0xb8] sm:$0xff] %vm2546, 0.0
    %2571 = vst.msk [vmem:[#allocation2 + $0xc0] sm:$0xff] %vm2546, 0.0
    %2572 = vst.msk [vmem:[#allocation2 + $0xc8] sm:$0xff] %vm2546, 0.0
    %2573 = vst.msk [vmem:[#allocation2 + $0xd0] sm:$0xff] %vm2546, 0.0
    %2574 = vst.msk [vmem:[#allocation2 + $0xd8] sm:$0xff] %vm2546, 0.0
    %2575 = vst.msk [vmem:[#allocation2 + $0xe0] sm:$0xff] %vm2546, 0.0
    %2576 = vst.msk [vmem:[#allocation2 + $0xe8] sm:$0xff] %vm2546, 0.0
    %2577 = vst.msk [vmem:[#allocation2 + $0xf0] sm:$0xff] %vm2546, 0.0
    %2578 = vst.msk [vmem:[#allocation2 + $0xf8] sm:$0xff] %vm2546, 0.0
    // Predicated region
    $region6: #{tpu_custom_call.1} parent=1 // pred_check
      _
    $region7: #{tpu_custom_call.1} parent=1 // pred_check_branch
      %2580 = sbr.rel (0) target = $region9
    $region8: #{tpu_custom_call.1} parent=1 // pred_region
      %s2582 = ssub.s32 4096, 4096
      %2583 = vsyncadd [#allocation3], %s2582
      %s2584 = sshll.u32 [#allocation2], 4
      %s2585 = int_to_ptr.vmem [resolvable:$true] %s2584
      %2590 = dma.vmem_to_hbm [thread:$0]  %s2585, 4096, %s1, [#allocation3], 128, 128, 8
    $region9: #{tpu_custom_call.1} parent=1 // pred_fallthru
      _
    // Predicated region
    $region10: #{tpu_custom_call.1} parent=1 // pred_check
      _
    $region11: #{tpu_custom_call.1} parent=1 // pred_check_branch
      %2592 = sbr.rel (0) target = $region13
    $region12: #{tpu_custom_call.1} parent=1 // pred_region
      %2593 = dma.done [#allocation3], 4096
    $region13: #{tpu_custom_call.1} parent=1 // pred_fallthru
      _
    %2594 = vsyncpa [#allocation3], 1

</llo_original>
